<compile_context>
chip_gen: v7x
topology: tpu7x:2x2x1
jax: 0.10.0
libtpu: 0.0.40
codegen_flags: <defaults>
</compile_context>

<pallas_src>
import functools

import jax
import jax.numpy as jnp
from jax.experimental import pallas as pl
from jax.experimental.pallas import tpu as pltpu


def _head_kernel(x_ref, w_attn_ref, b_attn_ref, w_fc_ref, b_fc_ref,
                 out_ref, acc_ref, *, total_t, block_t, blocks_per_split,
                 has_pad, unroll):
    """Grid: (t_splits [parallel], B//bb [parallel], blocks_per_split [arbitrary])."""
    si = pl.program_id(0)
    ti = pl.program_id(2)

    @pl.when(ti == 0)
    def _():
        acc_ref[...] = jnp.zeros_like(acc_ref)

    bb = acc_ref.shape[0]
    C = acc_ref.shape[1]
    feat_dtype = x_ref.dtype
    # attn 1x1-conv weight as a (1, C) row in the feature dtype: bf16 feeds the
    # MXU natively, so no full-tile f32 upcast is ever materialized.
    w_row = w_attn_ref[...].astype(feat_dtype)
    b_attn = b_attn_ref[0]                                   # f32 scalar (SMEM)
    # Unclamped global frame offset of this grid step.  The feature index_map
    # clamps its block index, so padded steps re-read the last real block;
    # masking below keeps those frames out of the accumulator.
    t_base = (si * blocks_per_split + ti) * block_t

    for b in range(bb):                                       # bb is tiny (1..8)
        def frame_body(t, row, _b=b):
            f = x_ref[_b, t]                                  # (C, S), native dtype
            # attn_conv: 1x1 Conv2d(C -> 1)  ==  (1, C) @ (C, S) on the MXU.
            logit = jnp.dot(w_row, f, preferred_element_type=jnp.float32)
            attn = jax.nn.sigmoid(logit + b_attn).astype(feat_dtype)    # (1, S)
            # attention-weighted spatial sum as an MXU NT contraction over S;
            # result is lane-dense over C: (1, S) . (C, S)^T -> (1, C).
            pooled = jax.lax.dot_general(
                attn, f, (((1,), (1,)), ((), ())),
                preferred_element_type=jnp.float32)
            if has_pad:
                # Cheap (1, C) select (not a (C, S) mask); also blocks NaN/Inf
                # coming from garbage reads in the padded temporal tail.
                valid = (t_base + t) < total_t
                pooled = jnp.where(valid, pooled, jnp.zeros_like(pooled))
            return row + pooled

        row = jax.lax.fori_loop(0, block_t, frame_body,
                                jnp.zeros((1, C), jnp.float32),
                                unroll=unroll)
        acc_ref[pl.ds(b, 1), :] += row                        # no concatenate

    @pl.when(ti == pl.num_programs(2) - 1)
    def _():
        # BN (eval running stats), dropout (eval identity), the 1/(T*S)
        # normalizer and the FC layer are folded into (w_fc_ref, b_fc_ref).
        logits = jnp.dot(acc_ref[...], w_fc_ref[...],
                         preferred_element_type=jnp.float32) + b_fc_ref[...]
        out_ref[0, 0] = logits.astype(out_ref.dtype)


def _pad(v, m):
    return ((v + m - 1) // m) * m


def video_classifier_head(feats, params, *, eps=1e-5, bb=1, tb=None,
                          t_splits=None, vmem_budget_bytes=None):
    """feats: (B, T, C, H, W) backbone feature maps.

    Preferred production input dtype is bf16 (halves HBM->VMEM DMA bytes on
    this bandwidth-bound head; ~2x on v5e); the kernel consumes it natively.
    """
    B, T, C, H, W = feats.shape
    S = H * W
    nc = params['w_fc'].shape[1]

    # (B,T,C,H,W) -> (B,T,C,S): merging two trailing contiguous dims is a pure
    # metadata reshape -- no HBM transpose.
    x = feats.reshape(B, T, C, S)
    itemsize = x.dtype.itemsize

    # Batch blocking: >1 batch block lets the "parallel" axes shard across
    # v7x's two TensorCores; harmless on 1-TC v5e/v6e.
    bb = max(1, min(bb, B))
    while B % bb:
        bb -= 1

    # ---- physically padded VMEM accounting (128 lanes / dtype-packed sublanes)
    sub = 8 * (4 // itemsize) if itemsize < 4 else 8          # 8 f32 / 16 bf16
    S_pad = _pad(S, 128)
    C_sub = _pad(C, sub)                                       # feature sublanes
    C_lane = _pad(C, 128)                                      # C as a lane dim
    Cp8 = _pad(C, 8)
    nc_pad = _pad(nc, 128)
    frame_block = bb * C_sub * S_pad * itemsize                # one frame step
    fixed_bytes = (
        2 * 8 * C_lane * 4                 # attn weight (1,C), double-buffered
        + 2 * Cp8 * nc_pad * 4             # folded fc weight (C,nc)
        + 2 * 8 * nc_pad * 4               # folded fc bias (1,nc)
        + _pad(bb, 8) * C_lane * 4         # accumulator scratch (bb,C)
        + 2 * _pad(bb, 8) * nc_pad * 4     # output block (1,1,bb,nc)
        + 4 * 2**20)                       # compiler-internal scratch headroom

    # Physical VMEM per TensorCore (64 MiB v7x, 128 MiB v5e/v6e), ~8 MiB headroom.
    try:
        phys_vmem = int(pltpu.get_tpu_info().vmem_capacity_bytes)
    except Exception:                                          # pragma: no cover
        phys_vmem = 64 * 2**20                                 # conservative (v7x)
    hard_cap = phys_vmem - 8 * 2**20

    feat_budget = hard_cap - fixed_bytes
    if vmem_budget_bytes is not None:
        feat_budget = min(feat_budget, int(vmem_budget_bytes))
    # Grow tb to fill the (double-buffered) padded feature-window budget.
    tb_auto = max(1, feat_budget // (2 * frame_block))
    if tb is None:
        tb = int(min(T, tb_auto))
    else:
        tb = int(max(1, min(tb, T, tb_auto)))

    nb_total = pl.cdiv(T, tb)                 # temporal blocks in HBM

    # v7x single-clip case: with one batch block, split the temporal reduction
    # across a leading "parallel" axis so both TensorCores get work; the FC
    # epilogue is linear, so per-split partial logits just sum in the wrapper.
    if t_splits is None:
        t_splits = 2 if (B // bb == 1 and nb_total >= 2) else 1
    t_splits = max(1, min(int(t_splits), nb_total))
    bps = pl.cdiv(nb_total, t_splits)         # temporal blocks per split
    has_pad = (t_splits * bps * tb) != T
    last_blk = nb_total - 1

    grid = (t_splits, B // bb, bps)

    # Fold BN (eval running stats) + 1/(T*S) pooling normalizer + FC into one
    # affine map; bias pre-divided by t_splits (partials are summed later).
    f32 = jnp.float32
    gamma = params['gamma'].astype(f32).reshape(1, C)
    beta = params['beta'].astype(f32).reshape(1, C)
    mean = params['running_mean'].astype(f32).reshape(1, C)
    var = params['running_var'].astype(f32).reshape(1, C)
    w_fc = params['w_fc'].astype(f32)                          # (C, nc)
    b_fc = params['b_fc'].astype(f32).reshape(1, nc)
    scale = gamma * jax.lax.rsqrt(var + eps)                   # (1, C)
    w_fc_fold = (scale.reshape(C, 1) * w_fc) / float(T * S)    # (C, nc)
    b_fc_fold = (b_fc + (beta - mean * scale) @ w_fc) / float(t_splits)
    w_attn_row = params['w_attn'].astype(f32).reshape(1, C)    # (1, C)
    b_attn = params['b_attn'].astype(f32).reshape(1)           # scalar -> SMEM

    # Frame-loop unroll: a divisor of tb, capped at 8 (bounds code size and
    # vreg live ranges while keeping LLO-visible ILP).
    unroll = next(u for u in (8, 7, 6, 5, 4, 3, 2, 1) if tb % u == 0)

    kernel = functools.partial(
        _head_kernel, total_t=T, block_t=tb, blocks_per_split=bps,
        has_pad=has_pad, unroll=unroll)

    vmem_limit = int(min(hard_cap,
                         max(16 * 2**20, 2 * tb * frame_block + fixed_bytes)))

    grid_spec = pltpu.PrefetchScalarGridSpec(
        num_scalar_prefetch=0,
        grid=grid,
        in_specs=[
            # features: clamp the global temporal block so padded steps stay
            # in-bounds (their frames are masked out in the kernel).
            pl.BlockSpec(
                (bb, tb, C, S),
                lambda si, bi, ti: (bi,
                                    jnp.minimum(si * bps + ti, last_blk),
                                    0, 0)),
            pl.BlockSpec((1, C), lambda si, bi, ti: (0, 0)),       # attn weight
            pl.BlockSpec(memory_space=pltpu.MemorySpace.SMEM),     # attn bias
            pl.BlockSpec((C, nc), lambda si, bi, ti: (0, 0)),      # folded fc W
            pl.BlockSpec((1, nc), lambda si, bi, ti: (0, 0)),      # folded fc b
        ],
        out_specs=pl.BlockSpec((1, 1, bb, nc),
                               lambda si, bi, ti: (si, bi, 0, 0)),
        scratch_shapes=[pltpu.VMEM((bb, C), jnp.float32)],
    )

    out = pl.pallas_call(
        kernel,
        out_shape=jax.ShapeDtypeStruct((t_splits, B // bb, bb, nc), jnp.float32),
        grid_spec=grid_spec,
        compiler_params=pltpu.CompilerParams(
            dimension_semantics=("parallel", "parallel", "arbitrary"),
            vmem_limit_bytes=vmem_limit),
    )(x, w_attn_row, b_attn, w_fc_fold, b_fc_fold)

    # Combine per-split partial logits (FC is linear; bias was pre-divided).
    return out.sum(axis=0).reshape(B, nc)


def reference_head(feats, params, eps=1e-5):
    """Pure-JAX reference mirroring the PyTorch forward (eval semantics)."""
    B, T, C, H, W = feats.shape
    fm = feats.astype(jnp.float32).reshape(B * T, C, H * W)              # (N, C, S)
    logit = jnp.einsum('ncs,c->ns', fm, params['w_attn'][:, 0]) + params['b_attn'][0, 0]
    attn = jax.nn.sigmoid(logit)[:, None, :]                             # (N, 1, S)
    pooled = jnp.mean(fm * attn, axis=2)                                 # (N, C)
    video_feat = pooled.reshape(B, T, C).mean(axis=1)                    # (B, C)
    xhat = (video_feat - params['running_mean']) / jnp.sqrt(params['running_var'] + eps)
    y = xhat * params['gamma'] + params['beta']
    return y @ params['w_fc'] + params['b_fc']


if __name__ == "__main__":
    # Small stand-in shapes: C=256 plays the role of the 2048-d ResNet feature,
    # H=W=8 the 1/32-downsampled spatial map, T=4 frames, num_classes=2.
    B, T, C, H, W = 2, 4, 256, 8, 8
    NUM_CLASSES = 2

    key = jax.random.PRNGKey(0)
    k_x, k_wa, k_ba, k_g, k_b, k_m, k_v, k_wf, k_bf = jax.random.split(key, 9)

    feats = jax.random.normal(k_x, (B, T, C, H, W), dtype=jnp.float32)

    params = {
        'w_attn': jax.random.normal(k_wa, (C, 1), dtype=jnp.float32) * 0.05,
        'b_attn': jax.random.normal(k_ba, (1, 1), dtype=jnp.float32) * 0.05,
        'gamma': 1.0 + 0.1 * jax.random.normal(k_g, (1, C), dtype=jnp.float32),
        'beta': 0.1 * jax.random.normal(k_b, (1, C), dtype=jnp.float32),
        'running_mean': 0.1 * jax.random.normal(k_m, (1, C), dtype=jnp.float32),
        'running_var': jax.random.uniform(k_v, (1, C), minval=0.5, maxval=1.5,
                                          dtype=jnp.float32),
        'w_fc': jax.random.normal(k_wf, (C, NUM_CLASSES), dtype=jnp.float32) * 0.05,
        'b_fc': jax.random.normal(k_bf, (1, NUM_CLASSES), dtype=jnp.float32) * 0.05,
    }

    ref = reference_head(feats, params)

    # 1) f32 features, auto tb (grows to cover all frames in one grid step).
    logits = video_classifier_head(feats, params)
    jax.block_until_ready(logits)
    assert logits.shape == (B, NUM_CLASSES)
    assert jnp.allclose(logits, ref, rtol=1e-4, atol=1e-4), (logits, ref)

    # 2) bf16 features (preferred production path: half the HBM DMA bytes;
    #    attention row is also bf16 in-kernel, hence the looser tolerance).
    feats_bf16 = feats.astype(jnp.bfloat16)
    logits_bf16 = video_classifier_head(feats_bf16, params)
    jax.block_until_ready(logits_bf16)
    ref_bf16 = reference_head(feats_bf16, params)
    assert jnp.allclose(logits_bf16, ref_bf16, rtol=2e-2, atol=2e-2), (logits_bf16, ref_bf16)

    # 3) batch-blocked path (bb=2): exercises per-row accumulator writes.
    logits_bb = video_classifier_head(feats, params, bb=2)
    jax.block_until_ready(logits_bb)
    assert jnp.allclose(logits_bb, ref, rtol=1e-4, atol=1e-4), (logits_bb, ref)

    # 4) single clip with a ragged T: forces the temporal split across the two
    #    "parallel" cores, the clamped feature index_map and the pooled tail mask.
    k_x1, _ = jax.random.split(k_x)
    feats1 = jax.random.normal(k_x1, (1, 5, C, H, W), dtype=jnp.float32)
    logits1 = video_classifier_head(feats1, params, tb=2)
    jax.block_until_ready(logits1)
    ref1 = reference_head(feats1, params)
    assert logits1.shape == (1, NUM_CLASSES)
    assert jnp.allclose(logits1, ref1, rtol=1e-4, atol=1e-4), (logits1, ref1)

    print("KERNEL_OK")
</pallas_src>

<mosaic_0001>
module attributes {stable_mosaic.version = 11 : i64} {
  func.func @_head_kernel(%arg0: i32, %arg1: i32, %arg2: i32, %arg3: memref<1x4x256x64xf32, #tpu.memory_space<vmem>>, %arg4: memref<1x256xf32, #tpu.memory_space<vmem>>, %arg5: memref<1xf32, #tpu.memory_space<smem>>, %arg6: memref<256x2xf32, #tpu.memory_space<vmem>>, %arg7: memref<1x2xf32, #tpu.memory_space<vmem>>, %arg8: memref<1x1x1x2xf32, #tpu.memory_space<vmem>>, %arg9: memref<1x256xf32, #tpu.memory_space<vmem>>) attributes {dimension_semantics = [#tpu.dimension_semantics<parallel>, #tpu.dimension_semantics<parallel>, #tpu.dimension_semantics<arbitrary>], iteration_bounds = array<i64: 1, 2, 1>, scalar_prefetch = 0 : i64, scratch_operands = 1 : i64, tpu.core_type = #tpu.core_type<tc>, window_params = [{transform_indices = @transform_0, window_bounds = array<i64: 1, 4, 256, 64>}, {pipeline_mode = #tpu.pipeline_mode<synchronous>, transform_indices = @transform_1, window_bounds = array<i64: 1, 256>}, {transform_indices = @transform_2, window_bounds = array<i64: 1>}, {pipeline_mode = #tpu.pipeline_mode<synchronous>, transform_indices = @transform_3, window_bounds = array<i64: 256, 2>}, {pipeline_mode = #tpu.pipeline_mode<synchronous>, transform_indices = @transform_4, window_bounds = array<i64: 1, 2>}, {transform_indices = @transform_5, window_bounds = array<i64: 1, 1, 1, 2>}]} {
    %c0_i32 = arith.constant 0 : i32
    %0 = arith.cmpi eq, %arg2, %c0_i32 : i32
    %1 = arith.extui %0 : i1 to i32
    %c0_i32_0 = arith.constant 0 : i32
    %2 = arith.cmpi ne, %1, %c0_i32_0 : i32
    scf.if %2 {
      %cst_34 = arith.constant 0.000000e+00 : f32
      %64 = vector.broadcast %cst_34 : f32 to vector<1x256xf32>
      %c0_35 = arith.constant 0 : index
      %c0_36 = arith.constant 0 : index
      %65 = vector.load %arg9[%c0_35, %c0_36] : memref<1x256xf32, #tpu.memory_space<vmem>>, vector<1x256xf32>
      tpu.vector_store %arg9[%c0_35, %c0_36], %64 {strides = array<i32>} : memref<1x256xf32, #tpu.memory_space<vmem>>, vector<1x256xf32>,
    } else {
    }
    %c0 = arith.constant 0 : index
    %c0_1 = arith.constant 0 : index
    %3 = vector.load %arg4[%c0, %c0_1] : memref<1x256xf32, #tpu.memory_space<vmem>>, vector<1x256xf32>
    %c0_2 = arith.constant 0 : index
    %4 = memref.load %arg5[%c0_2] : memref<1xf32, #tpu.memory_space<smem>>
    %cst = arith.constant 0.000000e+00 : f32
    %5 = vector.broadcast %cst : f32 to vector<1x256xf32>
    %c0_i32_3 = arith.constant 0 : i32
    %c0_4 = arith.constant 0 : index
    %6 = arith.index_cast %c0_i32_3 : i32 to index
    %c0_5 = arith.constant 0 : index
    %c0_6 = arith.constant 0 : index
    %7 = vector.load %arg3[%c0_4, %6, %c0_5, %c0_6] : memref<1x4x256x64xf32, #tpu.memory_space<vmem>>, vector<1x1x256x64xf32>
    %8 = vector.shape_cast %7 : vector<1x1x256x64xf32> to vector<256x64xf32>
    %cst_7 = arith.constant dense<0.000000e+00> : vector<1x64xf32>
    %9 = tpu.matmul %3, %8, %cst_7 {dimension_numbers = #tpu.dot_dimension_numbers<[1], [0], [0], [1], [0, 0, 1, 1], [], []>} : vector<1x256xf32>, vector<256x64xf32>, vector<1x64xf32> -> vector<1x64xf32>
    %10 = vector.broadcast %4 : f32 to vector<1x64xf32>
    %11 = arith.addf %9, %10 : vector<1x64xf32>
    %12 = arith.negf %11 : vector<1x64xf32>
    %13 = math.exp %12 : vector<1x64xf32>
    %cst_8 = arith.constant 1.000000e+00 : f32
    %14 = vector.broadcast %cst_8 : f32 to vector<1x64xf32>
    %15 = arith.addf %14, %13 : vector<1x64xf32>
    %16 = arith.divf %14, %15 : vector<1x64xf32>
    %cst_9 = arith.constant dense<0.000000e+00> : vector<1x256xf32>
    %17 = tpu.matmul %16, %8, %cst_9 {dimension_numbers = #tpu.dot_dimension_numbers<[1], [1], [0], [0], [0, 0, 1, 0], [], []>} : vector<1x64xf32>, vector<256x64xf32>, vector<1x256xf32> -> vector<1x256xf32>
    %18 = arith.addf %5, %17 : vector<1x256xf32>
    %c1_i32 = arith.constant 1 : i32
    %c0_10 = arith.constant 0 : index
    %19 = arith.index_cast %c1_i32 : i32 to index
    %c0_11 = arith.constant 0 : index
    %c0_12 = arith.constant 0 : index
    %20 = vector.load %arg3[%c0_10, %19, %c0_11, %c0_12] : memref<1x4x256x64xf32, #tpu.memory_space<vmem>>, vector<1x1x256x64xf32>
    %21 = vector.shape_cast %20 : vector<1x1x256x64xf32> to vector<256x64xf32>
    %cst_13 = arith.constant dense<0.000000e+00> : vector<1x64xf32>
    %22 = tpu.matmul %3, %21, %cst_13 {dimension_numbers = #tpu.dot_dimension_numbers<[1], [0], [0], [1], [0, 0, 1, 1], [], []>} : vector<1x256xf32>, vector<256x64xf32>, vector<1x64xf32> -> vector<1x64xf32>
    %23 = vector.broadcast %4 : f32 to vector<1x64xf32>
    %24 = arith.addf %22, %23 : vector<1x64xf32>
    %25 = arith.negf %24 : vector<1x64xf32>
    %26 = math.exp %25 : vector<1x64xf32>
    %cst_14 = arith.constant 1.000000e+00 : f32
    %27 = vector.broadcast %cst_14 : f32 to vector<1x64xf32>
    %28 = arith.addf %27, %26 : vector<1x64xf32>
    %29 = arith.divf %27, %28 : vector<1x64xf32>
    %cst_15 = arith.constant dense<0.000000e+00> : vector<1x256xf32>
    %30 = tpu.matmul %29, %21, %cst_15 {dimension_numbers = #tpu.dot_dimension_numbers<[1], [1], [0], [0], [0, 0, 1, 0], [], []>} : vector<1x64xf32>, vector<256x64xf32>, vector<1x256xf32> -> vector<1x256xf32>
    %31 = arith.addf %18, %30 : vector<1x256xf32>
    %c2_i32 = arith.constant 2 : i32
    %c0_16 = arith.constant 0 : index
    %32 = arith.index_cast %c2_i32 : i32 to index
    %c0_17 = arith.constant 0 : index
    %c0_18 = arith.constant 0 : index
    %33 = vector.load %arg3[%c0_16, %32, %c0_17, %c0_18] : memref<1x4x256x64xf32, #tpu.memory_space<vmem>>, vector<1x1x256x64xf32>
    %34 = vector.shape_cast %33 : vector<1x1x256x64xf32> to vector<256x64xf32>
    %cst_19 = arith.constant dense<0.000000e+00> : vector<1x64xf32>
    %35 = tpu.matmul %3, %34, %cst_19 {dimension_numbers = #tpu.dot_dimension_numbers<[1], [0], [0], [1], [0, 0, 1, 1], [], []>} : vector<1x256xf32>, vector<256x64xf32>, vector<1x64xf32> -> vector<1x64xf32>
    %36 = vector.broadcast %4 : f32 to vector<1x64xf32>
    %37 = arith.addf %35, %36 : vector<1x64xf32>
    %38 = arith.negf %37 : vector<1x64xf32>
    %39 = math.exp %38 : vector<1x64xf32>
    %cst_20 = arith.constant 1.000000e+00 : f32
    %40 = vector.broadcast %cst_20 : f32 to vector<1x64xf32>
    %41 = arith.addf %40, %39 : vector<1x64xf32>
    %42 = arith.divf %40, %41 : vector<1x64xf32>
    %cst_21 = arith.constant dense<0.000000e+00> : vector<1x256xf32>
    %43 = tpu.matmul %42, %34, %cst_21 {dimension_numbers = #tpu.dot_dimension_numbers<[1], [1], [0], [0], [0, 0, 1, 0], [], []>} : vector<1x64xf32>, vector<256x64xf32>, vector<1x256xf32> -> vector<1x256xf32>
    %44 = arith.addf %31, %43 : vector<1x256xf32>
    %c3_i32 = arith.constant 3 : i32
    %c0_22 = arith.constant 0 : index
    %45 = arith.index_cast %c3_i32 : i32 to index
    %c0_23 = arith.constant 0 : index
    %c0_24 = arith.constant 0 : index
    %46 = vector.load %arg3[%c0_22, %45, %c0_23, %c0_24] : memref<1x4x256x64xf32, #tpu.memory_space<vmem>>, vector<1x1x256x64xf32>
    %47 = vector.shape_cast %46 : vector<1x1x256x64xf32> to vector<256x64xf32>
    %cst_25 = arith.constant dense<0.000000e+00> : vector<1x64xf32>
    %48 = tpu.matmul %3, %47, %cst_25 {dimension_numbers = #tpu.dot_dimension_numbers<[1], [0], [0], [1], [0, 0, 1, 1], [], []>} : vector<1x256xf32>, vector<256x64xf32>, vector<1x64xf32> -> vector<1x64xf32>
    %49 = vector.broadcast %4 : f32 to vector<1x64xf32>
    %50 = arith.addf %48, %49 : vector<1x64xf32>
    %51 = arith.negf %50 : vector<1x64xf32>
    %52 = math.exp %51 : vector<1x64xf32>
    %cst_26 = arith.constant 1.000000e+00 : f32
    %53 = vector.broadcast %cst_26 : f32 to vector<1x64xf32>
    %54 = arith.addf %53, %52 : vector<1x64xf32>
    %55 = arith.divf %53, %54 : vector<1x64xf32>
    %cst_27 = arith.constant dense<0.000000e+00> : vector<1x256xf32>
    %56 = tpu.matmul %55, %47, %cst_27 {dimension_numbers = #tpu.dot_dimension_numbers<[1], [1], [0], [0], [0, 0, 1, 0], [], []>} : vector<1x64xf32>, vector<256x64xf32>, vector<1x256xf32> -> vector<1x256xf32>
    %57 = arith.addf %44, %56 : vector<1x256xf32>
    %c4_i32 = arith.constant 4 : i32
    %c0_28 = arith.constant 0 : index
    %c0_29 = arith.constant 0 : index
    %58 = vector.load %arg9[%c0_28, %c0_29] : memref<1x256xf32, #tpu.memory_space<vmem>>, vector<1x256xf32>
    %59 = arith.addf %58, %57 : vector<1x256xf32>
    %c0_30 = arith.constant 0 : index
    %c0_31 = arith.constant 0 : index
    %60 = vector.load %arg9[%c0_30, %c0_31] : memref<1x256xf32, #tpu.memory_space<vmem>>, vector<1x256xf32>
    tpu.vector_store %arg9[%c0_30, %c0_31], %59 {strides = array<i32>} : memref<1x256xf32, #tpu.memory_space<vmem>>, vector<1x256xf32>,
    %c0_i32_32 = arith.constant 0 : i32
    %61 = arith.cmpi eq, %arg2, %c0_i32_32 : i32
    %62 = arith.extui %61 : i1 to i32
    %c0_i32_33 = arith.constant 0 : i32
    %63 = arith.cmpi ne, %62, %c0_i32_33 : i32
    scf.if %63 {
      %c0_34 = arith.constant 0 : index
      %c0_35 = arith.constant 0 : index
      %64 = vector.load %arg9[%c0_34, %c0_35] : memref<1x256xf32, #tpu.memory_space<vmem>>, vector<1x256xf32>
      %c0_36 = arith.constant 0 : index
      %c0_37 = arith.constant 0 : index
      %65 = vector.load %arg6[%c0_36, %c0_37] : memref<256x2xf32, #tpu.memory_space<vmem>>, vector<256x2xf32>
      %cst_38 = arith.constant dense<0.000000e+00> : vector<1x2xf32>
      %66 = tpu.matmul %64, %65, %cst_38 {dimension_numbers = #tpu.dot_dimension_numbers<[1], [0], [0], [1], [0, 0, 1, 1], [], []>} : vector<1x256xf32>, vector<256x2xf32>, vector<1x2xf32> -> vector<1x2xf32>
      %c0_39 = arith.constant 0 : index
      %c0_40 = arith.constant 0 : index
      %67 = vector.load %arg7[%c0_39, %c0_40] : memref<1x2xf32, #tpu.memory_space<vmem>>, vector<1x2xf32>
      %68 = arith.addf %66, %67 : vector<1x2xf32>
      %c0_41 = arith.constant 0 : index
      %c0_42 = arith.constant 0 : index
      %c0_43 = arith.constant 0 : index
      %c0_44 = arith.constant 0 : index
      %69 = vector.load %arg8[%c0_41, %c0_42, %c0_43, %c0_44] : memref<1x1x1x2xf32, #tpu.memory_space<vmem>>, vector<1x1x1x2xf32>
      %70 = vector.shape_cast %69 : vector<1x1x1x2xf32> to vector<1x2xf32>
      %71 = vector.shape_cast %68 : vector<1x2xf32> to vector<1x1x1x2xf32>
      tpu.vector_store %arg8[%c0_41, %c0_42, %c0_43, %c0_44], %71 {strides = array<i32>} : memref<1x1x1x2xf32, #tpu.memory_space<vmem>>, vector<1x1x1x2xf32>,
    } else {
    }
    return
  }
  func.func @transform_0(%arg0: i32, %arg1: i32, %arg2: i32) -> (i32, i32, i32, i32) {
    %c1_i32 = arith.constant 1 : i32
    %0 = arith.muli %arg0, %c1_i32 : i32
    %1 = arith.addi %0, %arg2 : i32
    %c0_i32 = arith.constant 0 : i32
    %2 = arith.minsi %1, %c0_i32 : i32
    %c0_i32_0 = arith.constant 0 : i32
    %c0_i32_1 = arith.constant 0 : i32
    %c0_i32_2 = arith.constant 0 : i32
    return %arg1, %2, %c0_i32_0, %c0_i32_1 : i32, i32, i32, i32
  }
  func.func @transform_1(%arg0: i32, %arg1: i32, %arg2: i32) -> (i32, i32) {
    %c0_i32 = arith.constant 0 : i32
    %c0_i32_0 = arith.constant 0 : i32
    %c0_i32_1 = arith.constant 0 : i32
    return %c0_i32, %c0_i32_0 : i32, i32
  }
  func.func @transform_2(%arg0: i32, %arg1: i32, %arg2: i32) -> i32 {
    %c0_i32 = arith.constant 0 : i32
    %c0_i32_0 = arith.constant 0 : i32
    return %c0_i32 : i32
  }
  func.func @transform_3(%arg0: i32, %arg1: i32, %arg2: i32) -> (i32, i32) {
    %c0_i32 = arith.constant 0 : i32
    %c0_i32_0 = arith.constant 0 : i32
    %c0_i32_1 = arith.constant 0 : i32
    return %c0_i32, %c0_i32_0 : i32, i32
  }
  func.func @transform_4(%arg0: i32, %arg1: i32, %arg2: i32) -> (i32, i32) {
    %c0_i32 = arith.constant 0 : i32
    %c0_i32_0 = arith.constant 0 : i32
    %c0_i32_1 = arith.constant 0 : i32
    return %c0_i32, %c0_i32_0 : i32, i32
  }
  func.func @transform_5(%arg0: i32, %arg1: i32, %arg2: i32) -> (i32, i32, i32, i32) {
    %c0_i32 = arith.constant 0 : i32
    %c0_i32_0 = arith.constant 0 : i32
    %c0_i32_1 = arith.constant 0 : i32
    return %arg0, %arg1, %c0_i32, %c0_i32_0 : i32, i32, i32, i32
  }
}

</mosaic_0001>

<llo_original>
// kernel: tpu_custom_call.1
$region0: #{tpu_custom_call.1}
  #allocation0 [shape = 'u32[]', space=smem, size = 0x4, offset = 0x4, fixed_abs, tag = 'smem constant byte address 0x4 - core index']
  #allocation1 [shape = 'u32[144,128]{1,0:T(1,128)}', space=vmem, size = 0x12000, scoped, tag = 'internal scratch']
  #allocation2 [shape = 'f32[1,256]{1,0:T(1,128)}', space=vmem, size = 0x400, scoped, tag = 'scratch operand']
  #allocation3 [shape = 'f32[1]{0:T(128)S(6)}', space=smem, size = 0x200, scoped, tag = 'scoped memory for tpu_custom_call.1']
  %s0 = inlined_call_operand.vmem [shape: f32[2,4,256,64], index: 0, kind: input, shape index: {}]
  %s1 = inlined_call_operand.vmem [shape: f32[1,256], index: 1, kind: input, shape index: {}]
  %s2 = inlined_call_operand.<no memory space> [shape: f32[1], index: 2, kind: input, shape index: {}]
  %s3 = inlined_call_operand.vmem [shape: f32[256,2], index: 3, kind: input, shape index: {}]
  %s4 = inlined_call_operand.vmem [shape: f32[1,2], index: 4, kind: input, shape index: {}]
  %s5 = inlined_call_operand.hbm [shape: f32[1,2,1,2], index: 5, kind: output, shape index: {}]
  %s6 = sld [smem:[#allocation0]]
  $region61: #{tpu_custom_call.1} parent=0
    _
  %s8 = ssub.s32 1, %s6
  %s9 = scalar_select 0, %s8, %s6
  %10 = sst [smem:[#allocation3]] %s2
  $region1: #{tpu_custom_call.1} parent=0
    #allocation4 [shape = 'u8[1024]{0}', space=vmem, size = 0x400, scoped, tag = 'output window, operand 0']
    #allocation5 [shape = 's32[2]{0}', space=sflag, size = 0x8, scoped, tag = 'scoped memory for tpu_custom_call.1']
    %11 = vsyncpa [#allocation5], 0
    %s12 = scalar_lea.sflag [#allocation5], 1
    %13 = vsyncpa %s12, 0
    loop: start=0, step=1, limit=4
    $region2: #{tpu_custom_call.1} parent=1 // loop_pre_header
      _
    $region3: #{tpu_custom_call.1} parent=1 // loop_header
      %s15 = sphi 0, %s19
      %p16 = scmp.ge.s32.totalorder %s15, 4
      %s22 = sphi 0, %s41
      %s23 = sphi 0, %s37
      %s24 = sphi 0, %s33
      %s25 = sphi 0, %s22
      %s26 = sphi 0, %s23
      %s27 = sphi 0, %s24
      %s28 = sphi 0, %s25
      %s29 = sphi 0, %s26
      %s30 = sphi 0, %s27
      %s52 = sphi 0, %s54
      %s55 = sphi 0, %s52
      %s56 = sphi 0, %s55
      %s72 = sphi 0, %s56
      %s76 = sphi 0, %s76
      %s78 = sphi 0, %s76
      %s79 = sphi 0, %s78
      %s93 = sphi 0, %s79
      %s97 = sphi 0, %s97
      %s99 = sphi 0, %s97
      %s100 = sphi 0, %s99
      %s114 = sphi 0, %s100
      %s118 = sphi 0, %s118
      %s120 = sphi 0, %s118
      %s121 = sphi 0, %s120
      %s135 = sphi 0, %s121
      %s139 = sphi 0, %s139
      %s141 = sphi 0, %s139
      %s142 = sphi 0, %s141
      %s156 = sphi 0, %s142
      %s164 = sphi 0, %s166
      %s167 = sphi 0, %s164
      %s168 = sphi 0, %s167
      %s184 = sphi 0, %s168
    $region4: #{tpu_custom_call.1} parent=1 // loop_header_branch
      %18 = sbr.rel (%p16) target = $region8
    $region5: #{tpu_custom_call.1} parent=1 // loop_body
      %s20 = ssub.s32 %s15, 1
      %s21 = ssub.s32 %s15, 2
      %s31 = sadd.s32 1, %s24
      %p32 = scmp.ge.s32.totalorder %s31, 1
      %s33 = scalar_select %p32, 0, %s31
      %s34 = sadd.s32 1, %s23
      %s35 = scalar_select %p32, %s34, %s23
      %p36 = scmp.ge.s32.totalorder %s35, 2
      %s37 = scalar_select %p36, 0, %s35
      %s38 = sadd.s32 1, %s22
      %s39 = scalar_select %p36, %s38, %s22
      %p40 = scmp.ge.s32.totalorder %s39, 1
      %s41 = scalar_select %p40, 0, %s39
      %s42 = sadd.s32 %s22, %s24
      %p43 = scmp.lt.s32.totalorder %s42, 0
      %s44 = scalar_select %p43, %s42, 0
      %s45 = sadd.s32 %s41, %s33
      %p46 = scmp.lt.s32.totalorder %s45, 0
      %s47 = scalar_select %p46, %s45, 0
      %s48 = ssub.s32 %s23, %s37
      %s49 = ssub.s32 %s44, %s47
      %s50 = sor.u32 %s48, %s49
      %p51 = scmp.eq.s32.totalorder %s50, 0
      %s53 = sadd.s32 %s52, 1
      %s54 = scalar_select %p51, %s52, %s53
      %p57 = pneg %p51
      %p58 = scmp.eq.s32.totalorder %s15, 1
      %p59 = por %p57, %p58
      %p60 = scmp.ne.s32.totalorder %s52, %s55
      %p61 = scmp.eq.s32.totalorder %s15, 0
      %p62 = por %p60, %p61
      %p63 = scmp.ne.s32.totalorder %s52, %s55
      %p64 = scmp.eq.s32.totalorder %s20, 1
      %p65 = por %p63, %p64
      %p66 = scmp.ne.s32.totalorder %s55, %s56
      %p67 = scmp.eq.s32.totalorder %s20, 0
      %p68 = por %p66, %p67
      %p69 = scmp.ne.s32.totalorder %s55, %s56
      %p70 = scmp.eq.s32.totalorder %s21, 1
      %p71 = por %p69, %p70
      %p73 = scmp.ne.s32.totalorder %s56, %s72
      %p74 = scmp.eq.s32.totalorder %s21, 0
      %p75 = por %p73, %p74
      %s77 = sadd.s32 %s76, 1
      %p80 = scmp.eq.s32.totalorder %s15, 1
      %p81 = scmp.ne.s32.totalorder %s76, %s78
      %p82 = scmp.eq.s32.totalorder %s15, 0
      %p83 = por %p81, %p82
      %p84 = scmp.ne.s32.totalorder %s76, %s78
      %p85 = scmp.eq.s32.totalorder %s20, 1
      %p86 = por %p84, %p85
      %p87 = scmp.ne.s32.totalorder %s78, %s79
      %p88 = scmp.eq.s32.totalorder %s20, 0
      %p89 = por %p87, %p88
      %p90 = scmp.ne.s32.totalorder %s78, %s79
      %p91 = scmp.eq.s32.totalorder %s21, 1
      %p92 = por %p90, %p91
      %p94 = scmp.ne.s32.totalorder %s79, %s93
      %p95 = scmp.eq.s32.totalorder %s21, 0
      %p96 = por %p94, %p95
      %s98 = sadd.s32 %s97, 1
      %p101 = scmp.eq.s32.totalorder %s15, 1
      %p102 = scmp.ne.s32.totalorder %s97, %s99
      %p103 = scmp.eq.s32.totalorder %s15, 0
      %p104 = por %p102, %p103
      %p105 = scmp.ne.s32.totalorder %s97, %s99
      %p106 = scmp.eq.s32.totalorder %s20, 1
      %p107 = por %p105, %p106
      %p108 = scmp.ne.s32.totalorder %s99, %s100
      %p109 = scmp.eq.s32.totalorder %s20, 0
      %p110 = por %p108, %p109
      %p111 = scmp.ne.s32.totalorder %s99, %s100
      %p112 = scmp.eq.s32.totalorder %s21, 1
      %p113 = por %p111, %p112
      %p115 = scmp.ne.s32.totalorder %s100, %s114
      %p116 = scmp.eq.s32.totalorder %s21, 0
      %p117 = por %p115, %p116
      %s119 = sadd.s32 %s118, 1
      %p122 = scmp.eq.s32.totalorder %s15, 1
      %p123 = scmp.ne.s32.totalorder %s118, %s120
      %p124 = scmp.eq.s32.totalorder %s15, 0
      %p125 = por %p123, %p124
      %p126 = scmp.ne.s32.totalorder %s118, %s120
      %p127 = scmp.eq.s32.totalorder %s20, 1
      %p128 = por %p126, %p127
      %p129 = scmp.ne.s32.totalorder %s120, %s121
      %p130 = scmp.eq.s32.totalorder %s20, 0
      %p131 = por %p129, %p130
      %p132 = scmp.ne.s32.totalorder %s120, %s121
      %p133 = scmp.eq.s32.totalorder %s21, 1
      %p134 = por %p132, %p133
      %p136 = scmp.ne.s32.totalorder %s121, %s135
      %p137 = scmp.eq.s32.totalorder %s21, 0
      %p138 = por %p136, %p137
      %s140 = sadd.s32 %s139, 1
      %p143 = scmp.eq.s32.totalorder %s15, 1
      %p144 = scmp.ne.s32.totalorder %s139, %s141
      %p145 = scmp.eq.s32.totalorder %s15, 0
      %p146 = por %p144, %p145
      %p147 = scmp.ne.s32.totalorder %s139, %s141
      %p148 = scmp.eq.s32.totalorder %s20, 1
      %p149 = por %p147, %p148
      %p150 = scmp.ne.s32.totalorder %s141, %s142
      %p151 = scmp.eq.s32.totalorder %s20, 0
      %p152 = por %p150, %p151
      %p153 = scmp.ne.s32.totalorder %s141, %s142
      %p154 = scmp.eq.s32.totalorder %s21, 1
      %p155 = por %p153, %p154
      %p157 = scmp.ne.s32.totalorder %s142, %s156
      %p158 = scmp.eq.s32.totalorder %s21, 0
      %p159 = por %p157, %p158
      %s160 = ssub.s32 %s22, %s41
      %s161 = ssub.s32 %s23, %s37
      %s162 = sor.u32 %s160, %s161
      %p163 = scmp.eq.s32.totalorder %s162, 0
      %s165 = sadd.s32 %s164, 1
      %s166 = scalar_select %p163, %s164, %s165
      %p169 = pneg %p163
      %p170 = scmp.eq.s32.totalorder %s15, 1
      %p171 = por %p169, %p170
      %p172 = scmp.ne.s32.totalorder %s164, %s167
      %p173 = scmp.eq.s32.totalorder %s15, 0
      %p174 = por %p172, %p173
      %p175 = scmp.ne.s32.totalorder %s164, %s167
      %p176 = scmp.eq.s32.totalorder %s20, 1
      %p177 = por %p175, %p176
      %p178 = scmp.ne.s32.totalorder %s167, %s168
      %p179 = scmp.eq.s32.totalorder %s20, 0
      %p180 = por %p178, %p179
      %p181 = scmp.ne.s32.totalorder %s167, %s168
      %p182 = scmp.eq.s32.totalorder %s21, 1
      %p183 = por %p181, %p182
      %p185 = scmp.ne.s32.totalorder %s168, %s184
      %p186 = scmp.eq.s32.totalorder %s21, 0
      %p187 = por %p185, %p186
      %p188 = scmp.le.s32.totalorder 1, %s15
      %p189 = scmp.lt.s32.totalorder %s15, 3
      %p190 = pnand %p188, %p189
      %p191 = pneg %p190
      // Predicated region
      $region9: #{tpu_custom_call.1} parent=5 // pred_check
        _
      $region10: #{tpu_custom_call.1} parent=5 // pred_check_branch
        %193 = sbr.rel (%p190) target = $region12
      $region11: #{tpu_custom_call.1} parent=5 // pred_region
        %s194 = ssub.s32 %s15, 1
        // Predicated region
        $region13: #{tpu_custom_call.1} parent=11 // pred_check
          %p195 = pneg %p89
        $region14: #{tpu_custom_call.1} parent=11 // pred_check_branch
          %197 = sbr.rel (%p195) target = $region16
        $region15: #{tpu_custom_call.1} parent=11 // pred_region
          _
        $region16: #{tpu_custom_call.1} parent=11 // pred_fallthru
          _
        // Predicated region
        $region17: #{tpu_custom_call.1} parent=11 // pred_check
          %p198 = pneg %p110
        $region18: #{tpu_custom_call.1} parent=11 // pred_check_branch
          %200 = sbr.rel (%p198) target = $region20
        $region19: #{tpu_custom_call.1} parent=11 // pred_region
          _
        $region20: #{tpu_custom_call.1} parent=11 // pred_fallthru
          _
        // Predicated region
        $region21: #{tpu_custom_call.1} parent=11 // pred_check
          %p201 = pneg %p131
        $region22: #{tpu_custom_call.1} parent=11 // pred_check_branch
          %203 = sbr.rel (%p201) target = $region24
        $region23: #{tpu_custom_call.1} parent=11 // pred_region
          _
        $region24: #{tpu_custom_call.1} parent=11 // pred_fallthru
          _
        // Predicated region
        $region25: #{tpu_custom_call.1} parent=11 // pred_check
          %p204 = pneg %p152
        $region26: #{tpu_custom_call.1} parent=11 // pred_check_branch
          %206 = sbr.rel (%p204) target = $region28
        $region27: #{tpu_custom_call.1} parent=11 // pred_region
          _
        $region28: #{tpu_custom_call.1} parent=11 // pred_fallthru
          _
      $region12: #{tpu_custom_call.1} parent=5 // pred_fallthru
        _
      %p207 = scmp.lt.s32.totalorder %s15, 2
      // Predicated region
      $region29: #{tpu_custom_call.1} parent=5 // pred_check
        %p208 = pneg %p207
      $region30: #{tpu_custom_call.1} parent=5 // pred_check_branch
        %210 = sbr.rel (%p208) target = $region32
      $region31: #{tpu_custom_call.1} parent=5 // pred_region
        // Predicated region
        $region33: #{tpu_custom_call.1} parent=31 // pred_check
          %p211 = pneg %p62
        $region34: #{tpu_custom_call.1} parent=31 // pred_check_branch
          %213 = sbr.rel (%p211) target = $region36
        $region35: #{tpu_custom_call.1} parent=31 // pred_region
          %s214 = sadd.s32 %s22, %s24
          %p215 = scmp.lt.s32.totalorder %s214, 0
          %s216 = scalar_select %p215, %s214, 0
          %s217 = smul.u32 4, %s216
          %p218 = scmp.lt.s32.totalorder %s23, 1
          %s219 = scalar_select %p218, %s23, 1
          %p220 = scmp.lt.s32.totalorder %s217, 3
          %s221 = scalar_select %p220, %s217, 3
          %s222 = smul.addr %s221, 32
          %s223 = smul.addr %s219, 128
          %s224 = sadd.s32 %s222, %s223
          %s225 = smul.addr %s224, 8
          %s226 = scalar_lea.vmem %s0, %s225
          %s227 = sadd.s32 %s22, %s24
          %p228 = scmp.lt.s32.totalorder %s227, 0
          %s229 = scalar_select %p228, %s227, 0
          %s230 = smul.u32 4, %s229
        $region36: #{tpu_custom_call.1} parent=31 // pred_fallthru
          _
      $region32: #{tpu_custom_call.1} parent=5 // pred_fallthru
        _
      %p231 = scmp.le.s32.totalorder 1, %s15
      %p232 = scmp.lt.s32.totalorder %s15, 3
      %p233 = pnand %p231, %p232
      %p234 = pneg %p233
      // Predicated region
      $region37: #{tpu_custom_call.1} parent=5 // pred_check
        _
      $region38: #{tpu_custom_call.1} parent=5 // pred_check_branch
        %236 = sbr.rel (%p233) target = $region40
      $region39: #{tpu_custom_call.1} parent=5 // pred_region
        %s237 = ssub.s32 %s15, 1
        %s238 = sadd.s32 %s25, %s27
        %p239 = scmp.lt.s32.totalorder %s238, 0
        %s240 = scalar_select %p239, %s238, 0
        %s241 = smul.u32 4, %s240
        %p242 = scmp.lt.s32.totalorder %s26, 1
        %s243 = scalar_select %p242, %s26, 1
        %p244 = scmp.lt.s32.totalorder %s241, 3
        %s245 = scalar_select %p244, %s241, 3
        %s246 = smul.addr %s245, 32
        %s247 = smul.addr %s243, 128
        %s248 = sadd.s32 %s246, %s247
        %s249 = smul.addr %s248, 8
        %s250 = scalar_lea.vmem %s0, %s249
        %p251 = pneg %p68
        %p252 = pneg %p65
        %p253 = pneg %p89
        %p254 = pneg %p86
        %p255 = pneg %p110
        %p256 = pneg %p107
        %p257 = pneg %p131
        %p258 = pneg %p128
        %p259 = pneg %p152
        %p260 = pneg %p149
        %p261 = pneg %p180
        %p262 = pneg %p177
        %s263 = sand.u32 %s167, 1
        %s264 = scalar_lea.sflag [#allocation5], %s263
        %s265 = sand.u32 %s167, 1
        %s266 = scalar_lea.vmem [#allocation4], %s265
        %s267 = sadd.s32 %s25, %s27
        %p268 = scmp.lt.s32.totalorder %s267, 0
        %s269 = scalar_select %p268, %s267, 0
        %s270 = smul.u32 4, %s269
        %p271 = scmp.lt.s32.totalorder %s26, 1
        %s272 = scalar_select %p271, %s26, 1
        %p273 = scmp.lt.s32.totalorder %s270, 3
        %s274 = scalar_select %p273, %s270, 3
        %s275 = smul.addr %s274, 32
        %s276 = smul.addr %s272, 128
        %s277 = sadd.s32 %s275, %s276
        %s278 = smul.addr %s277, 8
        %s279 = scalar_lea.vmem %s0, %s278
        %s280 = sadd.s32 %s25, %s27
        %p281 = scmp.lt.s32.totalorder %s280, 0
        %s282 = scalar_select %p281, %s280, 0
        %s283 = smul.u32 4, %s282
        %p284 = scmp.eq.s32.totalorder %s27, 0
        // Predicated region
        $region41: #{tpu_custom_call.1} parent=39 // pred_check
          %p285 = pneg %p284
        $region42: #{tpu_custom_call.1} parent=39 // pred_check_branch
          %287 = sbr.rel (%p285) target = $region44
        $region43: #{tpu_custom_call.1} parent=39 // pred_region
          %v288 = vlaneseq
          %vm289 = vcmp.ge.s32.totalorder %v288, 0
          %vm290 = vcmp.lt.s32.totalorder %v288, 256
          %vm291 = vmand %vm289, %vm290
          %292 = vst.msk [vmem:[#allocation2] sm:$0x3] %vm291, 0.0
        $region44: #{tpu_custom_call.1} parent=39 // pred_fallthru
          _
        %v293 = vld [vmem:[%s1] sm:$0x3]
        %s294 = sld [smem:[#allocation3]]
        %v295 = vld [vmem:[%s279] sm:$0xff]
        %v296 = vld [vmem:[%s279 + $0x8] sm:$0xff]
        %v297 = vld [vmem:[%s279 + $0x10] sm:$0xff]
        %v298 = vld [vmem:[%s279 + $0x18] sm:$0xff]
        %v299 = vld [vmem:[%s279 + $0x20] sm:$0xff]
        %v300 = vld [vmem:[%s279 + $0x28] sm:$0xff]
        %v301 = vld [vmem:[%s279 + $0x30] sm:$0xff]
        %v302 = vld [vmem:[%s279 + $0x38] sm:$0xff]
        %v303 = vld [vmem:[%s279 + $0x40] sm:$0xff]
        %v304 = vld [vmem:[%s279 + $0x48] sm:$0xff]
        %v305 = vld [vmem:[%s279 + $0x50] sm:$0xff]
        %v306 = vld [vmem:[%s279 + $0x58] sm:$0xff]
        %v307 = vld [vmem:[%s279 + $0x60] sm:$0xff]
        %v308 = vld [vmem:[%s279 + $0x68] sm:$0xff]
        %v309 = vld [vmem:[%s279 + $0x70] sm:$0xff]
        %v310 = vld [vmem:[%s279 + $0x78] sm:$0xff]
        %v311 = vld [vmem:[%s279 + $0x80] sm:$0xff]
        %v312 = vld [vmem:[%s279 + $0x88] sm:$0xff]
        %v313 = vld [vmem:[%s279 + $0x90] sm:$0xff]
        %v314 = vld [vmem:[%s279 + $0x98] sm:$0xff]
        %v315 = vld [vmem:[%s279 + $0xa0] sm:$0xff]
        %v316 = vld [vmem:[%s279 + $0xa8] sm:$0xff]
        %v317 = vld [vmem:[%s279 + $0xb0] sm:$0xff]
        %v318 = vld [vmem:[%s279 + $0xb8] sm:$0xff]
        %v319 = vld [vmem:[%s279 + $0xc0] sm:$0xff]
        %v320 = vld [vmem:[%s279 + $0xc8] sm:$0xff]
        %v321 = vld [vmem:[%s279 + $0xd0] sm:$0xff]
        %v322 = vld [vmem:[%s279 + $0xd8] sm:$0xff]
        %v323 = vld [vmem:[%s279 + $0xe0] sm:$0xff]
        %v324 = vld [vmem:[%s279 + $0xe8] sm:$0xff]
        %v325 = vld [vmem:[%s279 + $0xf0] sm:$0xff]
        %v326 = vld [vmem:[%s279 + $0xf8] sm:$0xff]
        %v327 = vstv %s294
        %v329 = vlaneseq
        %v330 = vshrl.u32 %v329, 7
        %v331 = vsub.s32 0, %v330
        %v332 = vrot.slane %v293, %v331
        %v333 = vlaneseq
        %v334 = vshrl.u32 %v333, 7
        %v335 = vsub.s32 1, %v334
        %v336 = vrot.slane %v293, %v335
        %339 = vmatprep.subr.mxu0 0.0
        %340 = vmatpush1.msra.mxu0 %v295
        %341 = vmatprep.subr.mxu0 0.0
        %342 = vmatpush1.msra.mxu0 %v296
        %343 = vmatprep.subr.mxu0 0.0
        %344 = vmatpush1.msra.mxu0 %v297
        %345 = vmatprep.subr.mxu0 0.0
        %346 = vmatpush1.msra.mxu0 %v298
        %347 = vmatprep.subr.mxu0 0.0
        %348 = vmatpush1.msra.mxu0 %v299
        %349 = vmatprep.subr.mxu0 0.0
        %350 = vmatpush1.msra.mxu0 %v300
        %351 = vmatprep.subr.mxu0 0.0
        %352 = vmatpush1.msra.mxu0 %v301
        %353 = vmatprep.subr.mxu0 0.0
        %354 = vmatpush1.msra.mxu0 %v302
        %355 = vmatprep.subr.mxu0 0.0
        %356 = vmatpush1.msra.mxu0 %v303
        %357 = vmatprep.subr.mxu0 0.0
        %358 = vmatpush1.msra.mxu0 %v304
        %359 = vmatprep.subr.mxu0 0.0
        %360 = vmatpush1.msra.mxu0 %v305
        %361 = vmatprep.subr.mxu0 0.0
        %362 = vmatpush1.msra.mxu0 %v306
        %363 = vmatprep.subr.mxu0 0.0
        %364 = vmatpush1.msra.mxu0 %v307
        %365 = vmatprep.subr.mxu0 0.0
        %366 = vmatpush1.msra.mxu0 %v308
        %367 = vmatprep.subr.mxu0 0.0
        %368 = vmatpush1.msra.mxu0 %v309
        %369 = vmatprep.subr.mxu0 0.0
        %370 = vmatpush1.msra.mxu0 %v310
        %371 = vmatprep.subr.mxu0 0.0
        %372 = vmatpush1.msra.mxu0 %v311
        %373 = vmatprep.subr.mxu0 0.0
        %374 = vmatpush1.msra.mxu0 %v312
        %375 = vmatprep.subr.mxu0 0.0
        %376 = vmatpush1.msra.mxu0 %v313
        %377 = vmatprep.subr.mxu0 0.0
        %378 = vmatpush1.msra.mxu0 %v314
        %379 = vmatprep.subr.mxu0 0.0
        %380 = vmatpush1.msra.mxu0 %v315
        %381 = vmatprep.subr.mxu0 0.0
        %382 = vmatpush1.msra.mxu0 %v316
        %383 = vmatprep.subr.mxu0 0.0
        %384 = vmatpush1.msra.mxu0 %v317
        %385 = vmatprep.subr.mxu0 0.0
        %386 = vmatpush1.msra.mxu0 %v318
        %387 = vmatprep.subr.mxu0 0.0
        %388 = vmatpush1.msra.mxu0 %v319
        %389 = vmatprep.subr.mxu0 0.0
        %390 = vmatpush1.msra.mxu0 %v320
        %391 = vmatprep.subr.mxu0 0.0
        %392 = vmatpush1.msra.mxu0 %v321
        %393 = vmatprep.subr.mxu0 0.0
        %394 = vmatpush1.msra.mxu0 %v322
        %395 = vmatprep.subr.mxu0 0.0
        %396 = vmatpush1.msra.mxu0 %v323
        %397 = vmatprep.subr.mxu0 0.0
        %398 = vmatpush1.msra.mxu0 %v324
        %399 = vmatprep.subr.mxu0 0.0
        %400 = vmatpush1.msra.mxu0 %v325
        %401 = vmatprep.subr.mxu0 0.0
        %402 = vmatpush1.msra.mxu0 %v326
        %403 = vmatprep.mubr.f32.mxu0 %v336
        %404 = vmatmul.mubr.f32.gmra.mrb[0].mxu0 %v332
        %v405 = vpop.f32.mrb[0].mxu0
        %v406 = vadd.f32 %v327, %v405
        %v407 = vpop.f32.mrb[0].mxu0
        %408 = vdwg.mxu0
        %v409 = vxor.u32 %v406, 2147483648
        %v410 = vmul.f32 %v409, 1.442695
        %v411 = vpow.pop %v410
        %v412 = vadd.f32 %v411, 1.0
        %v413 = vrcp.pop %v412
        %v414 = vmul.f32 1.0, %v413
        %s415 = scalar_lea.vmem %s279, 256
        %v416 = vld [vmem:[%s415] sm:$0xff]
        %v417 = vld [vmem:[%s415 + $0x8] sm:$0xff]
        %v418 = vld [vmem:[%s415 + $0x10] sm:$0xff]
        %v419 = vld [vmem:[%s415 + $0x18] sm:$0xff]
        %v420 = vld [vmem:[%s415 + $0x20] sm:$0xff]
        %v421 = vld [vmem:[%s415 + $0x28] sm:$0xff]
        %v422 = vld [vmem:[%s415 + $0x30] sm:$0xff]
        %v423 = vld [vmem:[%s415 + $0x38] sm:$0xff]
        %v424 = vld [vmem:[%s415 + $0x40] sm:$0xff]
        %v425 = vld [vmem:[%s415 + $0x48] sm:$0xff]
        %v426 = vld [vmem:[%s415 + $0x50] sm:$0xff]
        %v427 = vld [vmem:[%s415 + $0x58] sm:$0xff]
        %v428 = vld [vmem:[%s415 + $0x60] sm:$0xff]
        %v429 = vld [vmem:[%s415 + $0x68] sm:$0xff]
        %v430 = vld [vmem:[%s415 + $0x70] sm:$0xff]
        %v431 = vld [vmem:[%s415 + $0x78] sm:$0xff]
        %v432 = vld [vmem:[%s415 + $0x80] sm:$0xff]
        %v433 = vld [vmem:[%s415 + $0x88] sm:$0xff]
        %v434 = vld [vmem:[%s415 + $0x90] sm:$0xff]
        %v435 = vld [vmem:[%s415 + $0x98] sm:$0xff]
        %v436 = vld [vmem:[%s415 + $0xa0] sm:$0xff]
        %v437 = vld [vmem:[%s415 + $0xa8] sm:$0xff]
        %v438 = vld [vmem:[%s415 + $0xb0] sm:$0xff]
        %v439 = vld [vmem:[%s415 + $0xb8] sm:$0xff]
        %v440 = vld [vmem:[%s415 + $0xc0] sm:$0xff]
        %v441 = vld [vmem:[%s415 + $0xc8] sm:$0xff]
        %v442 = vld [vmem:[%s415 + $0xd0] sm:$0xff]
        %v443 = vld [vmem:[%s415 + $0xd8] sm:$0xff]
        %v444 = vld [vmem:[%s415 + $0xe0] sm:$0xff]
        %v445 = vld [vmem:[%s415 + $0xe8] sm:$0xff]
        %v446 = vld [vmem:[%s415 + $0xf0] sm:$0xff]
        %v447 = vld [vmem:[%s415 + $0xf8] sm:$0xff]
        %448 = vmatprep.subr.mxu0 0.0
        %449 = vmatpush1.msra.mxu0 %v416
        %450 = vmatprep.subr.mxu0 0.0
        %451 = vmatpush1.msra.mxu0 %v417
        %452 = vmatprep.subr.mxu0 0.0
        %453 = vmatpush1.msra.mxu0 %v418
        %454 = vmatprep.subr.mxu0 0.0
        %455 = vmatpush1.msra.mxu0 %v419
        %456 = vmatprep.subr.mxu0 0.0
        %457 = vmatpush1.msra.mxu0 %v420
        %458 = vmatprep.subr.mxu0 0.0
        %459 = vmatpush1.msra.mxu0 %v421
        %460 = vmatprep.subr.mxu0 0.0
        %461 = vmatpush1.msra.mxu0 %v422
        %462 = vmatprep.subr.mxu0 0.0
        %463 = vmatpush1.msra.mxu0 %v423
        %464 = vmatprep.subr.mxu0 0.0
        %465 = vmatpush1.msra.mxu0 %v424
        %466 = vmatprep.subr.mxu0 0.0
        %467 = vmatpush1.msra.mxu0 %v425
        %468 = vmatprep.subr.mxu0 0.0
        %469 = vmatpush1.msra.mxu0 %v426
        %470 = vmatprep.subr.mxu0 0.0
        %471 = vmatpush1.msra.mxu0 %v427
        %472 = vmatprep.subr.mxu0 0.0
        %473 = vmatpush1.msra.mxu0 %v428
        %474 = vmatprep.subr.mxu0 0.0
        %475 = vmatpush1.msra.mxu0 %v429
        %476 = vmatprep.subr.mxu0 0.0
        %477 = vmatpush1.msra.mxu0 %v430
        %478 = vmatprep.subr.mxu0 0.0
        %479 = vmatpush1.msra.mxu0 %v431
        %480 = vmatprep.subr.mxu0 0.0
        %481 = vmatpush1.msra.mxu0 %v432
        %482 = vmatprep.subr.mxu0 0.0
        %483 = vmatpush1.msra.mxu0 %v433
        %484 = vmatprep.subr.mxu0 0.0
        %485 = vmatpush1.msra.mxu0 %v434
        %486 = vmatprep.subr.mxu0 0.0
        %487 = vmatpush1.msra.mxu0 %v435
        %488 = vmatprep.subr.mxu0 0.0
        %489 = vmatpush1.msra.mxu0 %v436
        %490 = vmatprep.subr.mxu0 0.0
        %491 = vmatpush1.msra.mxu0 %v437
        %492 = vmatprep.subr.mxu0 0.0
        %493 = vmatpush1.msra.mxu0 %v438
        %494 = vmatprep.subr.mxu0 0.0
        %495 = vmatpush1.msra.mxu0 %v439
        %496 = vmatprep.subr.mxu0 0.0
        %497 = vmatpush1.msra.mxu0 %v440
        %498 = vmatprep.subr.mxu0 0.0
        %499 = vmatpush1.msra.mxu0 %v441
        %500 = vmatprep.subr.mxu0 0.0
        %501 = vmatpush1.msra.mxu0 %v442
        %502 = vmatprep.subr.mxu0 0.0
        %503 = vmatpush1.msra.mxu0 %v443
        %504 = vmatprep.subr.mxu0 0.0
        %505 = vmatpush1.msra.mxu0 %v444
        %506 = vmatprep.subr.mxu0 0.0
        %507 = vmatpush1.msra.mxu0 %v445
        %508 = vmatprep.subr.mxu0 0.0
        %509 = vmatpush1.msra.mxu0 %v446
        %510 = vmatprep.subr.mxu0 0.0
        %511 = vmatpush1.msra.mxu0 %v447
        %512 = vmatprep.mubr.f32.mxu0 %v336
        %513 = vmatmul.mubr.f32.gmra.mrb[0].mxu0 %v332
        %v514 = vpop.f32.mrb[0].mxu0
        %v515 = vadd.f32 %v327, %v514
        %v516 = vpop.f32.mrb[0].mxu0
        %517 = vdwg.mxu0
        %v518 = vxor.u32 %v515, 2147483648
        %v519 = vmul.f32 %v518, 1.442695
        %v520 = vpow.pop %v519
        %v521 = vadd.f32 %v520, 1.0
        %v522 = vrcp.pop %v521
        %v523 = vmul.f32 1.0, %v522
        %vm524 = vcmask 523264
        %v526 = vsel %vm524, %v523, 0
        %v529 = vsel %vm524, %v416, 0
        %v532 = vsel %vm524, %v417, 0
        %v535 = vsel %vm524, %v418, 0
        %v538 = vsel %vm524, %v419, 0
        %v541 = vsel %vm524, %v420, 0
        %v544 = vsel %vm524, %v421, 0
        %v547 = vsel %vm524, %v422, 0
        %v550 = vsel %vm524, %v423, 0
        %v553 = vsel %vm524, %v424, 0
        %v556 = vsel %vm524, %v425, 0
        %v559 = vsel %vm524, %v426, 0
        %v562 = vsel %vm524, %v427, 0
        %v565 = vsel %vm524, %v428, 0
        %v568 = vsel %vm524, %v429, 0
        %v571 = vsel %vm524, %v430, 0
        %v574 = vsel %vm524, %v431, 0
        %v577 = vsel %vm524, %v432, 0
        %v580 = vsel %vm524, %v433, 0
        %v583 = vsel %vm524, %v434, 0
        %v586 = vsel %vm524, %v435, 0
        %v589 = vsel %vm524, %v436, 0
        %v592 = vsel %vm524, %v437, 0
        %v595 = vsel %vm524, %v438, 0
        %v598 = vsel %vm524, %v439, 0
        %v601 = vsel %vm524, %v440, 0
        %v604 = vsel %vm524, %v441, 0
        %v607 = vsel %vm524, %v442, 0
        %v610 = vsel %vm524, %v443, 0
        %v613 = vsel %vm524, %v444, 0
        %v616 = vsel %vm524, %v445, 0
        %v619 = vsel %vm524, %v446, 0
        %v622 = vsel %vm524, %v447, 0
        %624 = vmatprep.subr.mxu0 0.0
        %625 = vmatpush1.xpose.msra.mxu0 %v529
        %626 = vmatprep.subr.mxu0 0.0
        %627 = vmatpush1.xpose.msra.mxu0 %v532
        %628 = vmatprep.subr.mxu0 0.0
        %629 = vmatpush1.xpose.msra.mxu0 %v535
        %630 = vmatprep.subr.mxu0 0.0
        %631 = vmatpush1.xpose.msra.mxu0 %v538
        %632 = vmatprep.subr.mxu0 0.0
        %633 = vmatpush1.xpose.msra.mxu0 %v541
        %634 = vmatprep.subr.mxu0 0.0
        %635 = vmatpush1.xpose.msra.mxu0 %v544
        %636 = vmatprep.subr.mxu0 0.0
        %637 = vmatpush1.xpose.msra.mxu0 %v547
        %638 = vmatprep.subr.mxu0 0.0
        %639 = vmatpush1.xpose.msra.mxu0 %v550
        %640 = vmatprep.subr.mxu0 0.0
        %641 = vmatpush1.xpose.msra.mxu0 %v553
        %642 = vmatprep.subr.mxu0 0.0
        %643 = vmatpush1.xpose.msra.mxu0 %v556
        %644 = vmatprep.subr.mxu0 0.0
        %645 = vmatpush1.xpose.msra.mxu0 %v559
        %646 = vmatprep.subr.mxu0 0.0
        %647 = vmatpush1.xpose.msra.mxu0 %v562
        %648 = vmatprep.subr.mxu0 0.0
        %649 = vmatpush1.xpose.msra.mxu0 %v565
        %650 = vmatprep.subr.mxu0 0.0
        %651 = vmatpush1.xpose.msra.mxu0 %v568
        %652 = vmatprep.subr.mxu0 0.0
        %653 = vmatpush1.xpose.msra.mxu0 %v571
        %654 = vmatprep.subr.mxu0 0.0
        %655 = vmatpush1.xpose.msra.mxu0 %v574
        %656 = vmatprep.subr.mxu0 0.0
        %657 = vmatpush1.xpose.msra.mxu0 %v577
        %658 = vmatprep.subr.mxu0 0.0
        %659 = vmatpush1.xpose.msra.mxu0 %v580
        %660 = vmatprep.subr.mxu0 0.0
        %661 = vmatpush1.xpose.msra.mxu0 %v583
        %662 = vmatprep.subr.mxu0 0.0
        %663 = vmatpush1.xpose.msra.mxu0 %v586
        %664 = vmatprep.subr.mxu0 0.0
        %665 = vmatpush1.xpose.msra.mxu0 %v589
        %666 = vmatprep.subr.mxu0 0.0
        %667 = vmatpush1.xpose.msra.mxu0 %v592
        %668 = vmatprep.subr.mxu0 0.0
        %669 = vmatpush1.xpose.msra.mxu0 %v595
        %670 = vmatprep.subr.mxu0 0.0
        %671 = vmatpush1.xpose.msra.mxu0 %v598
        %672 = vmatprep.subr.mxu0 0.0
        %673 = vmatpush1.xpose.msra.mxu0 %v601
        %674 = vmatprep.subr.mxu0 0.0
        %675 = vmatpush1.xpose.msra.mxu0 %v604
        %676 = vmatprep.subr.mxu0 0.0
        %677 = vmatpush1.xpose.msra.mxu0 %v607
        %678 = vmatprep.subr.mxu0 0.0
        %679 = vmatpush1.xpose.msra.mxu0 %v610
        %680 = vmatprep.subr.mxu0 0.0
        %681 = vmatpush1.xpose.msra.mxu0 %v613
        %682 = vmatprep.subr.mxu0 0.0
        %683 = vmatpush1.xpose.msra.mxu0 %v616
        %684 = vmatprep.subr.mxu0 0.0
        %685 = vmatpush1.xpose.msra.mxu0 %v619
        %686 = vmatprep.subr.mxu0 0.0
        %687 = vmatpush1.xpose.msra.mxu0 %v622
        %688 = vmatprep.mubr.f32.mxu0 0.0
        %689 = vmatmul.mubr.f32.gmra.mrb[0].mxu0 %v526
        %v690 = vpop.f32.mrb[0].mxu0
        %v691 = vadd.f32 0.0, %v690
        %v692 = vpop.f32.mrb[0].mxu0
        %v693 = vadd.f32 0.0, %v692
        %694 = vdwg.mxu0
        %v696 = vsel %vm524, %v414, 0
        %v699 = vsel %vm524, %v295, 0
        %v702 = vsel %vm524, %v296, 0
        %v705 = vsel %vm524, %v297, 0
        %v708 = vsel %vm524, %v298, 0
        %v711 = vsel %vm524, %v299, 0
        %v714 = vsel %vm524, %v300, 0
        %v717 = vsel %vm524, %v301, 0
        %v720 = vsel %vm524, %v302, 0
        %v723 = vsel %vm524, %v303, 0
        %v726 = vsel %vm524, %v304, 0
        %v729 = vsel %vm524, %v305, 0
        %v732 = vsel %vm524, %v306, 0
        %v735 = vsel %vm524, %v307, 0
        %v738 = vsel %vm524, %v308, 0
        %v741 = vsel %vm524, %v309, 0
        %v744 = vsel %vm524, %v310, 0
        %v747 = vsel %vm524, %v311, 0
        %v750 = vsel %vm524, %v312, 0
        %v753 = vsel %vm524, %v313, 0
        %v756 = vsel %vm524, %v314, 0
        %v759 = vsel %vm524, %v315, 0
        %v762 = vsel %vm524, %v316, 0
        %v765 = vsel %vm524, %v317, 0
        %v768 = vsel %vm524, %v318, 0
        %v771 = vsel %vm524, %v319, 0
        %v774 = vsel %vm524, %v320, 0
        %v777 = vsel %vm524, %v321, 0
        %v780 = vsel %vm524, %v322, 0
        %v783 = vsel %vm524, %v323, 0
        %v786 = vsel %vm524, %v324, 0
        %v789 = vsel %vm524, %v325, 0
        %v792 = vsel %vm524, %v326, 0
        %794 = vmatprep.subr.mxu0 0.0
        %795 = vmatpush1.xpose.msra.mxu0 %v699
        %796 = vmatprep.subr.mxu0 0.0
        %797 = vmatpush1.xpose.msra.mxu0 %v702
        %798 = vmatprep.subr.mxu0 0.0
        %799 = vmatpush1.xpose.msra.mxu0 %v705
        %800 = vmatprep.subr.mxu0 0.0
        %801 = vmatpush1.xpose.msra.mxu0 %v708
        %802 = vmatprep.subr.mxu0 0.0
        %803 = vmatpush1.xpose.msra.mxu0 %v711
        %804 = vmatprep.subr.mxu0 0.0
        %805 = vmatpush1.xpose.msra.mxu0 %v714
        %806 = vmatprep.subr.mxu0 0.0
        %807 = vmatpush1.xpose.msra.mxu0 %v717
        %808 = vmatprep.subr.mxu0 0.0
        %809 = vmatpush1.xpose.msra.mxu0 %v720
        %810 = vmatprep.subr.mxu0 0.0
        %811 = vmatpush1.xpose.msra.mxu0 %v723
        %812 = vmatprep.subr.mxu0 0.0
        %813 = vmatpush1.xpose.msra.mxu0 %v726
        %814 = vmatprep.subr.mxu0 0.0
        %815 = vmatpush1.xpose.msra.mxu0 %v729
        %816 = vmatprep.subr.mxu0 0.0
        %817 = vmatpush1.xpose.msra.mxu0 %v732
        %818 = vmatprep.subr.mxu0 0.0
        %819 = vmatpush1.xpose.msra.mxu0 %v735
        %820 = vmatprep.subr.mxu0 0.0
        %821 = vmatpush1.xpose.msra.mxu0 %v738
        %822 = vmatprep.subr.mxu0 0.0
        %823 = vmatpush1.xpose.msra.mxu0 %v741
        %824 = vmatprep.subr.mxu0 0.0
        %825 = vmatpush1.xpose.msra.mxu0 %v744
        %826 = vmatprep.subr.mxu0 0.0
        %827 = vmatpush1.xpose.msra.mxu0 %v747
        %828 = vmatprep.subr.mxu0 0.0
        %829 = vmatpush1.xpose.msra.mxu0 %v750
        %830 = vmatprep.subr.mxu0 0.0
        %831 = vmatpush1.xpose.msra.mxu0 %v753
        %832 = vmatprep.subr.mxu0 0.0
        %833 = vmatpush1.xpose.msra.mxu0 %v756
        %834 = vmatprep.subr.mxu0 0.0
        %835 = vmatpush1.xpose.msra.mxu0 %v759
        %836 = vmatprep.subr.mxu0 0.0
        %837 = vmatpush1.xpose.msra.mxu0 %v762
        %838 = vmatprep.subr.mxu0 0.0
        %839 = vmatpush1.xpose.msra.mxu0 %v765
        %840 = vmatprep.subr.mxu0 0.0
        %841 = vmatpush1.xpose.msra.mxu0 %v768
        %842 = vmatprep.subr.mxu0 0.0
        %843 = vmatpush1.xpose.msra.mxu0 %v771
        %844 = vmatprep.subr.mxu0 0.0
        %845 = vmatpush1.xpose.msra.mxu0 %v774
        %846 = vmatprep.subr.mxu0 0.0
        %847 = vmatpush1.xpose.msra.mxu0 %v777
        %848 = vmatprep.subr.mxu0 0.0
        %849 = vmatpush1.xpose.msra.mxu0 %v780
        %850 = vmatprep.subr.mxu0 0.0
        %851 = vmatpush1.xpose.msra.mxu0 %v783
        %852 = vmatprep.subr.mxu0 0.0
        %853 = vmatpush1.xpose.msra.mxu0 %v786
        %854 = vmatprep.subr.mxu0 0.0
        %855 = vmatpush1.xpose.msra.mxu0 %v789
        %856 = vmatprep.subr.mxu0 0.0
        %857 = vmatpush1.xpose.msra.mxu0 %v792
        %858 = vmatprep.mubr.f32.mxu0 0.0
        %859 = vmatmul.mubr.f32.gmra.mrb[0].mxu0 %v696
        %v860 = vpop.f32.mrb[0].mxu0
        %v861 = vadd.f32 %v691, %v860
        %v862 = vpop.f32.mrb[0].mxu0
        %v863 = vadd.f32 %v693, %v862
        %864 = vdwg.mxu0
        %s865 = scalar_lea.vmem %s279, 512
        %v866 = vld [vmem:[%s865] sm:$0xff]
        %v867 = vld [vmem:[%s865 + $0x8] sm:$0xff]
        %v868 = vld [vmem:[%s865 + $0x10] sm:$0xff]
        %v869 = vld [vmem:[%s865 + $0x18] sm:$0xff]
        %v870 = vld [vmem:[%s865 + $0x20] sm:$0xff]
        %v871 = vld [vmem:[%s865 + $0x28] sm:$0xff]
        %v872 = vld [vmem:[%s865 + $0x30] sm:$0xff]
        %v873 = vld [vmem:[%s865 + $0x38] sm:$0xff]
        %v874 = vld [vmem:[%s865 + $0x40] sm:$0xff]
        %v875 = vld [vmem:[%s865 + $0x48] sm:$0xff]
        %v876 = vld [vmem:[%s865 + $0x50] sm:$0xff]
        %v877 = vld [vmem:[%s865 + $0x58] sm:$0xff]
        %v878 = vld [vmem:[%s865 + $0x60] sm:$0xff]
        %v879 = vld [vmem:[%s865 + $0x68] sm:$0xff]
        %v880 = vld [vmem:[%s865 + $0x70] sm:$0xff]
        %v881 = vld [vmem:[%s865 + $0x78] sm:$0xff]
        %v882 = vld [vmem:[%s865 + $0x80] sm:$0xff]
        %v883 = vld [vmem:[%s865 + $0x88] sm:$0xff]
        %v884 = vld [vmem:[%s865 + $0x90] sm:$0xff]
        %v885 = vld [vmem:[%s865 + $0x98] sm:$0xff]
        %v886 = vld [vmem:[%s865 + $0xa0] sm:$0xff]
        %v887 = vld [vmem:[%s865 + $0xa8] sm:$0xff]
        %v888 = vld [vmem:[%s865 + $0xb0] sm:$0xff]
        %v889 = vld [vmem:[%s865 + $0xb8] sm:$0xff]
        %v890 = vld [vmem:[%s865 + $0xc0] sm:$0xff]
        %v891 = vld [vmem:[%s865 + $0xc8] sm:$0xff]
        %v892 = vld [vmem:[%s865 + $0xd0] sm:$0xff]
        %v893 = vld [vmem:[%s865 + $0xd8] sm:$0xff]
        %v894 = vld [vmem:[%s865 + $0xe0] sm:$0xff]
        %v895 = vld [vmem:[%s865 + $0xe8] sm:$0xff]
        %v896 = vld [vmem:[%s865 + $0xf0] sm:$0xff]
        %v897 = vld [vmem:[%s865 + $0xf8] sm:$0xff]
        %898 = vmatprep.subr.mxu0 0.0
        %899 = vmatpush1.msra.mxu0 %v866
        %900 = vmatprep.subr.mxu0 0.0
        %901 = vmatpush1.msra.mxu0 %v867
        %902 = vmatprep.subr.mxu0 0.0
        %903 = vmatpush1.msra.mxu0 %v868
        %904 = vmatprep.subr.mxu0 0.0
        %905 = vmatpush1.msra.mxu0 %v869
        %906 = vmatprep.subr.mxu0 0.0
        %907 = vmatpush1.msra.mxu0 %v870
        %908 = vmatprep.subr.mxu0 0.0
        %909 = vmatpush1.msra.mxu0 %v871
        %910 = vmatprep.subr.mxu0 0.0
        %911 = vmatpush1.msra.mxu0 %v872
        %912 = vmatprep.subr.mxu0 0.0
        %913 = vmatpush1.msra.mxu0 %v873
        %914 = vmatprep.subr.mxu0 0.0
        %915 = vmatpush1.msra.mxu0 %v874
        %916 = vmatprep.subr.mxu0 0.0
        %917 = vmatpush1.msra.mxu0 %v875
        %918 = vmatprep.subr.mxu0 0.0
        %919 = vmatpush1.msra.mxu0 %v876
        %920 = vmatprep.subr.mxu0 0.0
        %921 = vmatpush1.msra.mxu0 %v877
        %922 = vmatprep.subr.mxu0 0.0
        %923 = vmatpush1.msra.mxu0 %v878
        %924 = vmatprep.subr.mxu0 0.0
        %925 = vmatpush1.msra.mxu0 %v879
        %926 = vmatprep.subr.mxu0 0.0
        %927 = vmatpush1.msra.mxu0 %v880
        %928 = vmatprep.subr.mxu0 0.0
        %929 = vmatpush1.msra.mxu0 %v881
        %930 = vmatprep.subr.mxu0 0.0
        %931 = vmatpush1.msra.mxu0 %v882
        %932 = vmatprep.subr.mxu0 0.0
        %933 = vmatpush1.msra.mxu0 %v883
        %934 = vmatprep.subr.mxu0 0.0
        %935 = vmatpush1.msra.mxu0 %v884
        %936 = vmatprep.subr.mxu0 0.0
        %937 = vmatpush1.msra.mxu0 %v885
        %938 = vmatprep.subr.mxu0 0.0
        %939 = vmatpush1.msra.mxu0 %v886
        %940 = vmatprep.subr.mxu0 0.0
        %941 = vmatpush1.msra.mxu0 %v887
        %942 = vmatprep.subr.mxu0 0.0
        %943 = vmatpush1.msra.mxu0 %v888
        %944 = vmatprep.subr.mxu0 0.0
        %945 = vmatpush1.msra.mxu0 %v889
        %946 = vmatprep.subr.mxu0 0.0
        %947 = vmatpush1.msra.mxu0 %v890
        %948 = vmatprep.subr.mxu0 0.0
        %949 = vmatpush1.msra.mxu0 %v891
        %950 = vmatprep.subr.mxu0 0.0
        %951 = vmatpush1.msra.mxu0 %v892
        %952 = vmatprep.subr.mxu0 0.0
        %953 = vmatpush1.msra.mxu0 %v893
        %954 = vmatprep.subr.mxu0 0.0
        %955 = vmatpush1.msra.mxu0 %v894
        %956 = vmatprep.subr.mxu0 0.0
        %957 = vmatpush1.msra.mxu0 %v895
        %958 = vmatprep.subr.mxu0 0.0
        %959 = vmatpush1.msra.mxu0 %v896
        %960 = vmatprep.subr.mxu0 0.0
        %961 = vmatpush1.msra.mxu0 %v897
        %962 = vmatprep.mubr.f32.mxu0 %v336
        %963 = vmatmul.mubr.f32.gmra.mrb[0].mxu0 %v332
        %v964 = vpop.f32.mrb[0].mxu0
        %v965 = vadd.f32 %v327, %v964
        %v966 = vpop.f32.mrb[0].mxu0
        %967 = vdwg.mxu0
        %v968 = vxor.u32 %v965, 2147483648
        %v969 = vmul.f32 %v968, 1.442695
        %v970 = vpow.pop %v969
        %v971 = vadd.f32 %v970, 1.0
        %v972 = vrcp.pop %v971
        %v973 = vmul.f32 1.0, %v972
        %v975 = vsel %vm524, %v973, 0
        %v978 = vsel %vm524, %v866, 0
        %v981 = vsel %vm524, %v867, 0
        %v984 = vsel %vm524, %v868, 0
        %v987 = vsel %vm524, %v869, 0
        %v990 = vsel %vm524, %v870, 0
        %v993 = vsel %vm524, %v871, 0
        %v996 = vsel %vm524, %v872, 0
        %v999 = vsel %vm524, %v873, 0
        %v1002 = vsel %vm524, %v874, 0
        %v1005 = vsel %vm524, %v875, 0
        %v1008 = vsel %vm524, %v876, 0
        %v1011 = vsel %vm524, %v877, 0
        %v1014 = vsel %vm524, %v878, 0
        %v1017 = vsel %vm524, %v879, 0
        %v1020 = vsel %vm524, %v880, 0
        %v1023 = vsel %vm524, %v881, 0
        %v1026 = vsel %vm524, %v882, 0
        %v1029 = vsel %vm524, %v883, 0
        %v1032 = vsel %vm524, %v884, 0
        %v1035 = vsel %vm524, %v885, 0
        %v1038 = vsel %vm524, %v886, 0
        %v1041 = vsel %vm524, %v887, 0
        %v1044 = vsel %vm524, %v888, 0
        %v1047 = vsel %vm524, %v889, 0
        %v1050 = vsel %vm524, %v890, 0
        %v1053 = vsel %vm524, %v891, 0
        %v1056 = vsel %vm524, %v892, 0
        %v1059 = vsel %vm524, %v893, 0
        %v1062 = vsel %vm524, %v894, 0
        %v1065 = vsel %vm524, %v895, 0
        %v1068 = vsel %vm524, %v896, 0
        %v1071 = vsel %vm524, %v897, 0
        %1073 = vmatprep.subr.mxu0 0.0
        %1074 = vmatpush1.xpose.msra.mxu0 %v978
        %1075 = vmatprep.subr.mxu0 0.0
        %1076 = vmatpush1.xpose.msra.mxu0 %v981
        %1077 = vmatprep.subr.mxu0 0.0
        %1078 = vmatpush1.xpose.msra.mxu0 %v984
        %1079 = vmatprep.subr.mxu0 0.0
        %1080 = vmatpush1.xpose.msra.mxu0 %v987
        %1081 = vmatprep.subr.mxu0 0.0
        %1082 = vmatpush1.xpose.msra.mxu0 %v990
        %1083 = vmatprep.subr.mxu0 0.0
        %1084 = vmatpush1.xpose.msra.mxu0 %v993
        %1085 = vmatprep.subr.mxu0 0.0
        %1086 = vmatpush1.xpose.msra.mxu0 %v996
        %1087 = vmatprep.subr.mxu0 0.0
        %1088 = vmatpush1.xpose.msra.mxu0 %v999
        %1089 = vmatprep.subr.mxu0 0.0
        %1090 = vmatpush1.xpose.msra.mxu0 %v1002
        %1091 = vmatprep.subr.mxu0 0.0
        %1092 = vmatpush1.xpose.msra.mxu0 %v1005
        %1093 = vmatprep.subr.mxu0 0.0
        %1094 = vmatpush1.xpose.msra.mxu0 %v1008
        %1095 = vmatprep.subr.mxu0 0.0
        %1096 = vmatpush1.xpose.msra.mxu0 %v1011
        %1097 = vmatprep.subr.mxu0 0.0
        %1098 = vmatpush1.xpose.msra.mxu0 %v1014
        %1099 = vmatprep.subr.mxu0 0.0
        %1100 = vmatpush1.xpose.msra.mxu0 %v1017
        %1101 = vmatprep.subr.mxu0 0.0
        %1102 = vmatpush1.xpose.msra.mxu0 %v1020
        %1103 = vmatprep.subr.mxu0 0.0
        %1104 = vmatpush1.xpose.msra.mxu0 %v1023
        %1105 = vmatprep.subr.mxu0 0.0
        %1106 = vmatpush1.xpose.msra.mxu0 %v1026
        %1107 = vmatprep.subr.mxu0 0.0
        %1108 = vmatpush1.xpose.msra.mxu0 %v1029
        %1109 = vmatprep.subr.mxu0 0.0
        %1110 = vmatpush1.xpose.msra.mxu0 %v1032
        %1111 = vmatprep.subr.mxu0 0.0
        %1112 = vmatpush1.xpose.msra.mxu0 %v1035
        %1113 = vmatprep.subr.mxu0 0.0
        %1114 = vmatpush1.xpose.msra.mxu0 %v1038
        %1115 = vmatprep.subr.mxu0 0.0
        %1116 = vmatpush1.xpose.msra.mxu0 %v1041
        %1117 = vmatprep.subr.mxu0 0.0
        %1118 = vmatpush1.xpose.msra.mxu0 %v1044
        %1119 = vmatprep.subr.mxu0 0.0
        %1120 = vmatpush1.xpose.msra.mxu0 %v1047
        %1121 = vmatprep.subr.mxu0 0.0
        %1122 = vmatpush1.xpose.msra.mxu0 %v1050
        %1123 = vmatprep.subr.mxu0 0.0
        %1124 = vmatpush1.xpose.msra.mxu0 %v1053
        %1125 = vmatprep.subr.mxu0 0.0
        %1126 = vmatpush1.xpose.msra.mxu0 %v1056
        %1127 = vmatprep.subr.mxu0 0.0
        %1128 = vmatpush1.xpose.msra.mxu0 %v1059
        %1129 = vmatprep.subr.mxu0 0.0
        %1130 = vmatpush1.xpose.msra.mxu0 %v1062
        %1131 = vmatprep.subr.mxu0 0.0
        %1132 = vmatpush1.xpose.msra.mxu0 %v1065
        %1133 = vmatprep.subr.mxu0 0.0
        %1134 = vmatpush1.xpose.msra.mxu0 %v1068
        %1135 = vmatprep.subr.mxu0 0.0
        %1136 = vmatpush1.xpose.msra.mxu0 %v1071
        %1137 = vmatprep.mubr.f32.mxu0 0.0
        %1138 = vmatmul.mubr.f32.gmra.mrb[0].mxu0 %v975
        %v1139 = vpop.f32.mrb[0].mxu0
        %v1140 = vadd.f32 0.0, %v1139
        %v1141 = vpop.f32.mrb[0].mxu0
        %v1142 = vadd.f32 0.0, %v1141
        %1143 = vdwg.mxu0
        %v1144 = vadd.f32 %v861, %v1140
        %v1145 = vadd.f32 %v863, %v1142
        %s1146 = scalar_lea.vmem %s279, 768
        %v1147 = vld [vmem:[%s1146] sm:$0xff]
        %v1148 = vld [vmem:[%s1146 + $0x8] sm:$0xff]
        %v1149 = vld [vmem:[%s1146 + $0x10] sm:$0xff]
        %v1150 = vld [vmem:[%s1146 + $0x18] sm:$0xff]
        %v1151 = vld [vmem:[%s1146 + $0x20] sm:$0xff]
        %v1152 = vld [vmem:[%s1146 + $0x28] sm:$0xff]
        %v1153 = vld [vmem:[%s1146 + $0x30] sm:$0xff]
        %v1154 = vld [vmem:[%s1146 + $0x38] sm:$0xff]
        %v1155 = vld [vmem:[%s1146 + $0x40] sm:$0xff]
        %v1156 = vld [vmem:[%s1146 + $0x48] sm:$0xff]
        %v1157 = vld [vmem:[%s1146 + $0x50] sm:$0xff]
        %v1158 = vld [vmem:[%s1146 + $0x58] sm:$0xff]
        %v1159 = vld [vmem:[%s1146 + $0x60] sm:$0xff]
        %v1160 = vld [vmem:[%s1146 + $0x68] sm:$0xff]
        %v1161 = vld [vmem:[%s1146 + $0x70] sm:$0xff]
        %v1162 = vld [vmem:[%s1146 + $0x78] sm:$0xff]
        %v1163 = vld [vmem:[%s1146 + $0x80] sm:$0xff]
        %v1164 = vld [vmem:[%s1146 + $0x88] sm:$0xff]
        %v1165 = vld [vmem:[%s1146 + $0x90] sm:$0xff]
        %v1166 = vld [vmem:[%s1146 + $0x98] sm:$0xff]
        %v1167 = vld [vmem:[%s1146 + $0xa0] sm:$0xff]
        %v1168 = vld [vmem:[%s1146 + $0xa8] sm:$0xff]
        %v1169 = vld [vmem:[%s1146 + $0xb0] sm:$0xff]
        %v1170 = vld [vmem:[%s1146 + $0xb8] sm:$0xff]
        %v1171 = vld [vmem:[%s1146 + $0xc0] sm:$0xff]
        %v1172 = vld [vmem:[%s1146 + $0xc8] sm:$0xff]
        %v1173 = vld [vmem:[%s1146 + $0xd0] sm:$0xff]
        %v1174 = vld [vmem:[%s1146 + $0xd8] sm:$0xff]
        %v1175 = vld [vmem:[%s1146 + $0xe0] sm:$0xff]
        %v1176 = vld [vmem:[%s1146 + $0xe8] sm:$0xff]
        %v1177 = vld [vmem:[%s1146 + $0xf0] sm:$0xff]
        %v1178 = vld [vmem:[%s1146 + $0xf8] sm:$0xff]
        %1179 = vmatprep.subr.mxu0 0.0
        %1180 = vmatpush1.msra.mxu0 %v1147
        %1181 = vmatprep.subr.mxu0 0.0
        %1182 = vmatpush1.msra.mxu0 %v1148
        %1183 = vmatprep.subr.mxu0 0.0
        %1184 = vmatpush1.msra.mxu0 %v1149
        %1185 = vmatprep.subr.mxu0 0.0
        %1186 = vmatpush1.msra.mxu0 %v1150
        %1187 = vmatprep.subr.mxu0 0.0
        %1188 = vmatpush1.msra.mxu0 %v1151
        %1189 = vmatprep.subr.mxu0 0.0
        %1190 = vmatpush1.msra.mxu0 %v1152
        %1191 = vmatprep.subr.mxu0 0.0
        %1192 = vmatpush1.msra.mxu0 %v1153
        %1193 = vmatprep.subr.mxu0 0.0
        %1194 = vmatpush1.msra.mxu0 %v1154
        %1195 = vmatprep.subr.mxu0 0.0
        %1196 = vmatpush1.msra.mxu0 %v1155
        %1197 = vmatprep.subr.mxu0 0.0
        %1198 = vmatpush1.msra.mxu0 %v1156
        %1199 = vmatprep.subr.mxu0 0.0
        %1200 = vmatpush1.msra.mxu0 %v1157
        %1201 = vmatprep.subr.mxu0 0.0
        %1202 = vmatpush1.msra.mxu0 %v1158
        %1203 = vmatprep.subr.mxu0 0.0
        %1204 = vmatpush1.msra.mxu0 %v1159
        %1205 = vmatprep.subr.mxu0 0.0
        %1206 = vmatpush1.msra.mxu0 %v1160
        %1207 = vmatprep.subr.mxu0 0.0
        %1208 = vmatpush1.msra.mxu0 %v1161
        %1209 = vmatprep.subr.mxu0 0.0
        %1210 = vmatpush1.msra.mxu0 %v1162
        %1211 = vmatprep.subr.mxu0 0.0
        %1212 = vmatpush1.msra.mxu0 %v1163
        %1213 = vmatprep.subr.mxu0 0.0
        %1214 = vmatpush1.msra.mxu0 %v1164
        %1215 = vmatprep.subr.mxu0 0.0
        %1216 = vmatpush1.msra.mxu0 %v1165
        %1217 = vmatprep.subr.mxu0 0.0
        %1218 = vmatpush1.msra.mxu0 %v1166
        %1219 = vmatprep.subr.mxu0 0.0
        %1220 = vmatpush1.msra.mxu0 %v1167
        %1221 = vmatprep.subr.mxu0 0.0
        %1222 = vmatpush1.msra.mxu0 %v1168
        %1223 = vmatprep.subr.mxu0 0.0
        %1224 = vmatpush1.msra.mxu0 %v1169
        %1225 = vmatprep.subr.mxu0 0.0
        %1226 = vmatpush1.msra.mxu0 %v1170
        %1227 = vmatprep.subr.mxu0 0.0
        %1228 = vmatpush1.msra.mxu0 %v1171
        %1229 = vmatprep.subr.mxu0 0.0
        %1230 = vmatpush1.msra.mxu0 %v1172
        %1231 = vmatprep.subr.mxu0 0.0
        %1232 = vmatpush1.msra.mxu0 %v1173
        %1233 = vmatprep.subr.mxu0 0.0
        %1234 = vmatpush1.msra.mxu0 %v1174
        %1235 = vmatprep.subr.mxu0 0.0
        %1236 = vmatpush1.msra.mxu0 %v1175
        %1237 = vmatprep.subr.mxu0 0.0
        %1238 = vmatpush1.msra.mxu0 %v1176
        %1239 = vmatprep.subr.mxu0 0.0
        %1240 = vmatpush1.msra.mxu0 %v1177
        %1241 = vmatprep.subr.mxu0 0.0
        %1242 = vmatpush1.msra.mxu0 %v1178
        %1243 = vmatprep.mubr.f32.mxu0 %v336
        %1244 = vmatmul.mubr.f32.gmra.mrb[0].mxu0 %v332
        %v1245 = vpop.f32.mrb[0].mxu0
        %v1246 = vadd.f32 %v327, %v1245
        %v1247 = vpop.f32.mrb[0].mxu0
        %1248 = vdwg.mxu0
        %v1249 = vxor.u32 %v1246, 2147483648
        %v1250 = vmul.f32 %v1249, 1.442695
        %v1251 = vpow.pop %v1250
        %v1252 = vadd.f32 %v1251, 1.0
        %v1253 = vrcp.pop %v1252
        %v1254 = vmul.f32 1.0, %v1253
        %v1256 = vsel %vm524, %v1254, 0
        %v1259 = vsel %vm524, %v1147, 0
        %v1262 = vsel %vm524, %v1148, 0
        %v1265 = vsel %vm524, %v1149, 0
        %v1268 = vsel %vm524, %v1150, 0
        %v1271 = vsel %vm524, %v1151, 0
        %v1274 = vsel %vm524, %v1152, 0
        %v1277 = vsel %vm524, %v1153, 0
        %v1280 = vsel %vm524, %v1154, 0
        %v1283 = vsel %vm524, %v1155, 0
        %v1286 = vsel %vm524, %v1156, 0
        %v1289 = vsel %vm524, %v1157, 0
        %v1292 = vsel %vm524, %v1158, 0
        %v1295 = vsel %vm524, %v1159, 0
        %v1298 = vsel %vm524, %v1160, 0
        %v1301 = vsel %vm524, %v1161, 0
        %v1304 = vsel %vm524, %v1162, 0
        %v1307 = vsel %vm524, %v1163, 0
        %v1310 = vsel %vm524, %v1164, 0
        %v1313 = vsel %vm524, %v1165, 0
        %v1316 = vsel %vm524, %v1166, 0
        %v1319 = vsel %vm524, %v1167, 0
        %v1322 = vsel %vm524, %v1168, 0
        %v1325 = vsel %vm524, %v1169, 0
        %v1328 = vsel %vm524, %v1170, 0
        %v1331 = vsel %vm524, %v1171, 0
        %v1334 = vsel %vm524, %v1172, 0
        %v1337 = vsel %vm524, %v1173, 0
        %v1340 = vsel %vm524, %v1174, 0
        %v1343 = vsel %vm524, %v1175, 0
        %v1346 = vsel %vm524, %v1176, 0
        %v1349 = vsel %vm524, %v1177, 0
        %v1352 = vsel %vm524, %v1178, 0
        %1354 = vmatprep.subr.mxu0 0.0
        %1355 = vmatpush1.xpose.msra.mxu0 %v1259
        %1356 = vmatprep.subr.mxu0 0.0
        %1357 = vmatpush1.xpose.msra.mxu0 %v1262
        %1358 = vmatprep.subr.mxu0 0.0
        %1359 = vmatpush1.xpose.msra.mxu0 %v1265
        %1360 = vmatprep.subr.mxu0 0.0
        %1361 = vmatpush1.xpose.msra.mxu0 %v1268
        %1362 = vmatprep.subr.mxu0 0.0
        %1363 = vmatpush1.xpose.msra.mxu0 %v1271
        %1364 = vmatprep.subr.mxu0 0.0
        %1365 = vmatpush1.xpose.msra.mxu0 %v1274
        %1366 = vmatprep.subr.mxu0 0.0
        %1367 = vmatpush1.xpose.msra.mxu0 %v1277
        %1368 = vmatprep.subr.mxu0 0.0
        %1369 = vmatpush1.xpose.msra.mxu0 %v1280
        %1370 = vmatprep.subr.mxu0 0.0
        %1371 = vmatpush1.xpose.msra.mxu0 %v1283
        %1372 = vmatprep.subr.mxu0 0.0
        %1373 = vmatpush1.xpose.msra.mxu0 %v1286
        %1374 = vmatprep.subr.mxu0 0.0
        %1375 = vmatpush1.xpose.msra.mxu0 %v1289
        %1376 = vmatprep.subr.mxu0 0.0
        %1377 = vmatpush1.xpose.msra.mxu0 %v1292
        %1378 = vmatprep.subr.mxu0 0.0
        %1379 = vmatpush1.xpose.msra.mxu0 %v1295
        %1380 = vmatprep.subr.mxu0 0.0
        %1381 = vmatpush1.xpose.msra.mxu0 %v1298
        %1382 = vmatprep.subr.mxu0 0.0
        %1383 = vmatpush1.xpose.msra.mxu0 %v1301
        %1384 = vmatprep.subr.mxu0 0.0
        %1385 = vmatpush1.xpose.msra.mxu0 %v1304
        %1386 = vmatprep.subr.mxu0 0.0
        %1387 = vmatpush1.xpose.msra.mxu0 %v1307
        %1388 = vmatprep.subr.mxu0 0.0
        %1389 = vmatpush1.xpose.msra.mxu0 %v1310
        %1390 = vmatprep.subr.mxu0 0.0
        %1391 = vmatpush1.xpose.msra.mxu0 %v1313
        %1392 = vmatprep.subr.mxu0 0.0
        %1393 = vmatpush1.xpose.msra.mxu0 %v1316
        %1394 = vmatprep.subr.mxu0 0.0
        %1395 = vmatpush1.xpose.msra.mxu0 %v1319
        %1396 = vmatprep.subr.mxu0 0.0
        %1397 = vmatpush1.xpose.msra.mxu0 %v1322
        %1398 = vmatprep.subr.mxu0 0.0
        %1399 = vmatpush1.xpose.msra.mxu0 %v1325
        %1400 = vmatprep.subr.mxu0 0.0
        %1401 = vmatpush1.xpose.msra.mxu0 %v1328
        %1402 = vmatprep.subr.mxu0 0.0
        %1403 = vmatpush1.xpose.msra.mxu0 %v1331
        %1404 = vmatprep.subr.mxu0 0.0
        %1405 = vmatpush1.xpose.msra.mxu0 %v1334
        %1406 = vmatprep.subr.mxu0 0.0
        %1407 = vmatpush1.xpose.msra.mxu0 %v1337
        %1408 = vmatprep.subr.mxu0 0.0
        %1409 = vmatpush1.xpose.msra.mxu0 %v1340
        %1410 = vmatprep.subr.mxu0 0.0
        %1411 = vmatpush1.xpose.msra.mxu0 %v1343
        %1412 = vmatprep.subr.mxu0 0.0
        %1413 = vmatpush1.xpose.msra.mxu0 %v1346
        %1414 = vmatprep.subr.mxu0 0.0
        %1415 = vmatpush1.xpose.msra.mxu0 %v1349
        %1416 = vmatprep.subr.mxu0 0.0
        %1417 = vmatpush1.xpose.msra.mxu0 %v1352
        %1418 = vmatprep.mubr.f32.mxu0 0.0
        %1419 = vmatmul.mubr.f32.gmra.mrb[0].mxu0 %v1256
        %v1420 = vpop.f32.mrb[0].mxu0
        %v1421 = vadd.f32 0.0, %v1420
        %v1422 = vpop.f32.mrb[0].mxu0
        %v1423 = vadd.f32 0.0, %v1422
        %1424 = vdwg.mxu0
        %v1425 = vadd.f32 %v1144, %v1421
        %v1426 = vadd.f32 %v1145, %v1423
        %v1427 = vld [vmem:[#allocation2] sm:$0x3]
        %v1430 = vcombine.low %v1425, %v1426
        %v1432 = vunpack.c.l.s4 1966171168
        %v1433 = vunpack.c.0.s8 %v1432
        %v1434 = vlaneseq
        %v1435 = vshrl.u32 %v1434, 7
        %v1436 = vsub.s32 %v1433, %v1435
        %v1437 = vrot.slane %v1430, %v1436
        %v1439 = vunpack.c.l.s4 1966171168
        %v1440 = vunpack.c.0.s8 %v1439
        %v1441 = vlaneseq
        %v1442 = vshrl.u32 %v1441, 7
        %v1443 = vsub.s32 %v1440, %v1442
        %v1444 = vrot.slane %v1437, %v1443
        %v1446 = vadd.f32 %v1427, %v1444
        %v1447 = vlaneseq
        %vm1448 = vcmp.ge.s32.totalorder %v1447, 0
        %vm1449 = vcmp.lt.s32.totalorder %v1447, 256
        %vm1450 = vmand %vm1448, %vm1449
        %1451 = vst.msk [vmem:[#allocation2] sm:$0x3] %vm1450, %v1446
        // Predicated region
        $region45: #{tpu_custom_call.1} parent=39 // pred_check
          %p1452 = pneg %p284
        $region46: #{tpu_custom_call.1} parent=39 // pred_check_branch
          %1454 = sbr.rel (%p1452) target = $region48
        $region47: #{tpu_custom_call.1} parent=39 // pred_region
          %v1455 = vld [vmem:[#allocation2] sm:$0x3]
          %v1456 = vld [vmem:[%s3] sm:$0xff]
          %v1457 = vld [vmem:[%s3 + $0x8] sm:$0xff]
          %v1458 = vld [vmem:[%s3 + $0x10] sm:$0xff]
          %v1459 = vld [vmem:[%s3 + $0x18] sm:$0xff]
          %v1460 = vld [vmem:[%s3 + $0x20] sm:$0xff]
          %v1461 = vld [vmem:[%s3 + $0x28] sm:$0xff]
          %v1462 = vld [vmem:[%s3 + $0x30] sm:$0xff]
          %v1463 = vld [vmem:[%s3 + $0x38] sm:$0xff]
          %v1464 = vld [vmem:[%s3 + $0x40] sm:$0xff]
          %v1465 = vld [vmem:[%s3 + $0x48] sm:$0xff]
          %v1466 = vld [vmem:[%s3 + $0x50] sm:$0xff]
          %v1467 = vld [vmem:[%s3 + $0x58] sm:$0xff]
          %v1468 = vld [vmem:[%s3 + $0x60] sm:$0xff]
          %v1469 = vld [vmem:[%s3 + $0x68] sm:$0xff]
          %v1470 = vld [vmem:[%s3 + $0x70] sm:$0xff]
          %v1471 = vld [vmem:[%s3 + $0x78] sm:$0xff]
          %v1472 = vld [vmem:[%s3 + $0x80] sm:$0xff]
          %v1473 = vld [vmem:[%s3 + $0x88] sm:$0xff]
          %v1474 = vld [vmem:[%s3 + $0x90] sm:$0xff]
          %v1475 = vld [vmem:[%s3 + $0x98] sm:$0xff]
          %v1476 = vld [vmem:[%s3 + $0xa0] sm:$0xff]
          %v1477 = vld [vmem:[%s3 + $0xa8] sm:$0xff]
          %v1478 = vld [vmem:[%s3 + $0xb0] sm:$0xff]
          %v1479 = vld [vmem:[%s3 + $0xb8] sm:$0xff]
          %v1480 = vld [vmem:[%s3 + $0xc0] sm:$0xff]
          %v1481 = vld [vmem:[%s3 + $0xc8] sm:$0xff]
          %v1482 = vld [vmem:[%s3 + $0xd0] sm:$0xff]
          %v1483 = vld [vmem:[%s3 + $0xd8] sm:$0xff]
          %v1484 = vld [vmem:[%s3 + $0xe0] sm:$0xff]
          %v1485 = vld [vmem:[%s3 + $0xe8] sm:$0xff]
          %v1486 = vld [vmem:[%s3 + $0xf0] sm:$0xff]
          %v1487 = vld [vmem:[%s3 + $0xf8] sm:$0xff]
          %v1488 = vld [vmem:[%s4] sm:$0x1]
          %v1490 = vlaneseq
          %v1491 = vshrl.u32 %v1490, 7
          %v1492 = vsub.s32 0, %v1491
          %v1493 = vrot.slane %v1455, %v1492
          %v1494 = vlaneseq
          %v1495 = vshrl.u32 %v1494, 7
          %v1496 = vsub.s32 1, %v1495
          %v1497 = vrot.slane %v1455, %v1496
          %1500 = vmatprep.subr.mxu0 0.0
          %1501 = vmatpush1.msra.mxu0 %v1456
          %1502 = vmatprep.subr.mxu0 0.0
          %1503 = vmatpush1.msra.mxu0 %v1457
          %1504 = vmatprep.subr.mxu0 0.0
          %1505 = vmatpush1.msra.mxu0 %v1458
          %1506 = vmatprep.subr.mxu0 0.0
          %1507 = vmatpush1.msra.mxu0 %v1459
          %1508 = vmatprep.subr.mxu0 0.0
          %1509 = vmatpush1.msra.mxu0 %v1460
          %1510 = vmatprep.subr.mxu0 0.0
          %1511 = vmatpush1.msra.mxu0 %v1461
          %1512 = vmatprep.subr.mxu0 0.0
          %1513 = vmatpush1.msra.mxu0 %v1462
          %1514 = vmatprep.subr.mxu0 0.0
          %1515 = vmatpush1.msra.mxu0 %v1463
          %1516 = vmatprep.subr.mxu0 0.0
          %1517 = vmatpush1.msra.mxu0 %v1464
          %1518 = vmatprep.subr.mxu0 0.0
          %1519 = vmatpush1.msra.mxu0 %v1465
          %1520 = vmatprep.subr.mxu0 0.0
          %1521 = vmatpush1.msra.mxu0 %v1466
          %1522 = vmatprep.subr.mxu0 0.0
          %1523 = vmatpush1.msra.mxu0 %v1467
          %1524 = vmatprep.subr.mxu0 0.0
          %1525 = vmatpush1.msra.mxu0 %v1468
          %1526 = vmatprep.subr.mxu0 0.0
          %1527 = vmatpush1.msra.mxu0 %v1469
          %1528 = vmatprep.subr.mxu0 0.0
          %1529 = vmatpush1.msra.mxu0 %v1470
          %1530 = vmatprep.subr.mxu0 0.0
          %1531 = vmatpush1.msra.mxu0 %v1471
          %1532 = vmatprep.subr.mxu0 0.0
          %1533 = vmatpush1.msra.mxu0 %v1472
          %1534 = vmatprep.subr.mxu0 0.0
          %1535 = vmatpush1.msra.mxu0 %v1473
          %1536 = vmatprep.subr.mxu0 0.0
          %1537 = vmatpush1.msra.mxu0 %v1474
          %1538 = vmatprep.subr.mxu0 0.0
          %1539 = vmatpush1.msra.mxu0 %v1475
          %1540 = vmatprep.subr.mxu0 0.0
          %1541 = vmatpush1.msra.mxu0 %v1476
          %1542 = vmatprep.subr.mxu0 0.0
          %1543 = vmatpush1.msra.mxu0 %v1477
          %1544 = vmatprep.subr.mxu0 0.0
          %1545 = vmatpush1.msra.mxu0 %v1478
          %1546 = vmatprep.subr.mxu0 0.0
          %1547 = vmatpush1.msra.mxu0 %v1479
          %1548 = vmatprep.subr.mxu0 0.0
          %1549 = vmatpush1.msra.mxu0 %v1480
          %1550 = vmatprep.subr.mxu0 0.0
          %1551 = vmatpush1.msra.mxu0 %v1481
          %1552 = vmatprep.subr.mxu0 0.0
          %1553 = vmatpush1.msra.mxu0 %v1482
          %1554 = vmatprep.subr.mxu0 0.0
          %1555 = vmatpush1.msra.mxu0 %v1483
          %1556 = vmatprep.subr.mxu0 0.0
          %1557 = vmatpush1.msra.mxu0 %v1484
          %1558 = vmatprep.subr.mxu0 0.0
          %1559 = vmatpush1.msra.mxu0 %v1485
          %1560 = vmatprep.subr.mxu0 0.0
          %1561 = vmatpush1.msra.mxu0 %v1486
          %1562 = vmatprep.subr.mxu0 0.0
          %1563 = vmatpush1.msra.mxu0 %v1487
          %1564 = vmatprep.mubr.f32.mxu0 %v1497
          %1565 = vmatmul.mubr.f32.gmra.mrb[0].mxu0 %v1493
          %v1566 = vpop.f32.mrb[0].mxu0
          %v1567 = vadd.f32 %v1488, %v1566
          %v1568 = vpop.f32.mrb[0].mxu0
          %1569 = vdwg.mxu0
          %vm1570 = vcmask 8192
          %1571 = vst.msk [vmem:[%s266] sm:$0x1] %vm1570, %v1567
        $region48: #{tpu_custom_call.1} parent=39 // pred_fallthru
          _
        %s1572 = sand.u32 %s167, 1
        %s1573 = scalar_lea.sflag [#allocation5], %s1572
        %s1574 = sand.u32 %s167, 1
        %s1575 = scalar_lea.vmem [#allocation4], %s1574
        // Predicated region
        $region49: #{tpu_custom_call.1} parent=39 // pred_check
          %p1576 = pneg %p177
        $region50: #{tpu_custom_call.1} parent=39 // pred_check_branch
          %1578 = sbr.rel (%p1576) target = $region52
        $region51: #{tpu_custom_call.1} parent=39 // pred_region
          %s1580 = ssub.s32 16, 16
          %1581 = vsyncadd %s1573, %s1580
          %s1582 = smul.addr %s25, 2
          %s1583 = sadd.s32 %s26, %s1582
          %s1584 = smul.addr %s1583, 16
          %s1585 = scalar_lea.hbm %s5, %s1584
          %s1587 = sshll.u32 %s1575, 4
          %s1588 = int_to_ptr.vmem [resolvable:$true] %s1587
          %1590 = dma.vmem_to_hbm [thread:$0]  %s1588, 16, %s1585, %s1573
        $region52: #{tpu_custom_call.1} parent=39 // pred_fallthru
          _
      $region40: #{tpu_custom_call.1} parent=5 // pred_fallthru
        _
      %p1591 = scmp.le.s32.totalorder 2, %s15
      // Predicated region
      $region53: #{tpu_custom_call.1} parent=5 // pred_check
        %p1592 = pneg %p1591
      $region54: #{tpu_custom_call.1} parent=5 // pred_check_branch
        %1594 = sbr.rel (%p1592) target = $region56
      $region55: #{tpu_custom_call.1} parent=5 // pred_region
        %s1595 = ssub.s32 %s15, 2
        // Predicated region
        $region57: #{tpu_custom_call.1} parent=55 // pred_check
          %p1596 = pneg %p183
        $region58: #{tpu_custom_call.1} parent=55 // pred_check_branch
          %1598 = sbr.rel (%p1596) target = $region60
        $region59: #{tpu_custom_call.1} parent=55 // pred_region
          %s1599 = sand.u32 %s168, 1
          %s1600 = scalar_lea.sflag [#allocation5], %s1599
          %s1601 = sand.u32 %s168, 1
          %s1602 = scalar_lea.vmem [#allocation4], %s1601
          %1603 = dma.done %s1600, 16
        $region60: #{tpu_custom_call.1} parent=55 // pred_fallthru
          _
      $region56: #{tpu_custom_call.1} parent=5 // pred_fallthru
        _
    $region6: #{tpu_custom_call.1} parent=1 // loop_footer
      %s19 = sadd.s32 1, %s15
    $region7: #{tpu_custom_call.1} parent=1 // loop_footer_branch
      %14 = sbr.rel target = $region3
    $region8: #{tpu_custom_call.1} parent=1 // loop_exit
      _
    %1604 = vsyncpa [#allocation5], 1
    %s1605 = scalar_lea.sflag [#allocation5], 1
    %1606 = vsyncpa %s1605, 1

</llo_original>
